<compile_context>
chip_gen: v7x
topology: tpu7x:2x2x1
jax: 0.10.0
libtpu: 0.0.40
codegen_flags: <defaults>
</compile_context>

<pallas_src>
import numpy as np
import jax
import jax.numpy as jnp
from jax.experimental import pallas as pl
from jax.experimental.pallas import tpu as pltpu

NEG_SLOPE = 0.01   # nn.LeakyReLU default negative_slope
BN_EPS = 1e-5      # nn.BatchNorm1d default eps


def _lrelu(x):
    return jnp.where(x >= 0, x, NEG_SLOPE * x)


def _ceil128(n):
    return ((int(n) + 127) // 128) * 128


# ------------------------------ fused kernel -------------------------------

def _make_kernel(prep, B):
    H = prep["H"]
    L1H = prep["L1H"]
    LpHp = prep["LpHp"]
    A_pad = prep["A_pad"]
    OFF_BIN = prep["OFF_BIN"]
    OFF_BG = prep["OFF_BG"]
    OFF_BOUT = prep["OFF_BOUT"]
    OFF_B1 = prep["OFF_B1"]
    OFF_B2 = prep["OFF_B2"]

    def kernel(x_ref, w_in_ref, w1_ref, w2_ref, wih_ref, whh_ref, wout_ref,
               bias_ref, state0_ref, logits_ref, state_ref):
        # ---- unpack the lane-aligned bias pack (static, 128-aligned offsets) ----
        b_in = bias_ref[:, OFF_BIN:OFF_BIN + H]
        bg = bias_ref[:, OFF_BG:OFF_BG + 4 * H]
        bout = bias_ref[:, OFF_BOUT:OFF_BOUT + A_pad]
        b1 = bias_ref[:, OFF_B1:OFF_B1 + L1H]
        b2 = bias_ref[:, OFF_B2:OFF_B2 + 2 * LpHp]

        # ---- fc_in: Linear(obs -> H) + LeakyReLU   (Dropout p=0 -> identity) ----
        s = _lrelu(jnp.dot(x_ref[...], w_in_ref[...],
                           preferred_element_type=jnp.float32) + b_in)

        # ---- conv1 (k=4, s=2) as structured dense matmul + LeakyReLU.
        #      BN1 is folded into w2/b2 downstream. ----
        y1 = _lrelu(jnp.dot(s, w1_ref[...],
                            preferred_element_type=jnp.float32) + b1)        # (B, L1H)

        # ---- conv2 (k=3, s=1): even & odd pooled positions in ONE fused matmul,
        #      then MaxPool(2,2) (= max of the halves) then LeakyReLU.
        #      BN2 is folded into wih/bg downstream. ----
        z2 = jnp.dot(y1, w2_ref[...],
                     preferred_element_type=jnp.float32) + b2                # (B, 2*LpHp)
        z = _lrelu(jnp.maximum(z2[:, :LpHp], z2[:, LpHp:]))                  # (B, LpHp)

        # ---- LSTM (unbatched: the B rows are time steps), gate order i, f, g, o.
        #      Channel-first flatten + BN2 are folded into wih's rows. ----
        gx = jnp.dot(z, wih_ref[...],
                     preferred_element_type=jnp.float32) + bg                # (B, 4H)

        whh = whh_ref[...]                                                   # (H, 4H)
        h = state0_ref[0:1, :]
        c = state0_ref[1:2, :]
        hs = []
        for t in range(B):                     # static unroll (tiny sequence)
            # single 128-wide hidden matmul per step (1 MXU push, not 4)
            g = gx[t:t + 1, :] + jnp.dot(h, whh, preferred_element_type=jnp.float32)
            gi = jax.nn.sigmoid(g[:, 0:H])
            gf = jax.nn.sigmoid(g[:, H:2 * H])
            gg = jnp.tanh(g[:, 2 * H:3 * H])
            go = jax.nn.sigmoid(g[:, 3 * H:4 * H])
            c = gf * c + gi * gg
            h = go * jnp.tanh(c)
            hs.append(h)
        hseq = jnp.concatenate(hs, axis=0)                                   # (B, H), in vregs

        # ---- LeakyReLU + fc_out (lane-padded weight -> lane-dense store) ----
        logits_ref[...] = (jnp.dot(_lrelu(hseq), wout_ref[...],
                                   preferred_element_type=jnp.float32) + bout)
        state_ref[...] = jnp.concatenate([h, c], axis=0)                     # (2, H)

    return kernel


# ----------------------- one-time parameter preparation --------------------

def prepare_params(params):
    """Fold layouts / BN stats / conv structure into matmul-ready tensors (one time)."""
    H = params["w_in"].shape[0]
    A = params["fc_out_w"].shape[0]
    L1 = (H - 4) // 2 + 1          # Conv1d(1, H, k=4, s=2) output length
    L2 = L1 - 2                    # Conv1d(H, H, k=3, s=1) output length
    Lp = L2 // 2                   # MaxPool1d(2, 2) output length
    L1H = L1 * H
    LpH = Lp * H
    LpHp = _ceil128(LpH)           # lane-padded pooled width (vreg-aligned split)
    A_pad = max(128, _ceil128(A))
    f32 = jnp.float32

    # fc_in
    w_in_t = params["w_in"].T.astype(f32)                         # (obs, H)
    b_in = params["b_in"].astype(f32)                             # (H,)

    # conv1 as a dense structured weight: (H,) -> (L1*H,), position-major/channel-minor
    P1 = np.zeros((H, L1, 4), np.float32)
    for l in range(L1):
        for k in range(4):
            P1[2 * l + k, l, k] = 1.0
    w1k = params["conv1_w"][:, 0, :]                              # (H_out, 4)
    W1d = jnp.einsum("jlk,ok->jlo", jnp.asarray(P1), w1k).reshape(H, L1H).astype(f32)
    b1 = jnp.tile(params["conv1_b"], L1).astype(f32)              # (L1H,)

    # BN1 (eval) affine, tiled in y1's (position-major, channel-minor) layout
    bn1_scale = params["bn1_gamma"] / jnp.sqrt(params["bn1_var"] + BN_EPS)
    bn1_shift = params["bn1_beta"] - params["bn1_mean"] * bn1_scale
    s1_full = jnp.tile(bn1_scale, L1)                             # (L1H,)
    t1_full = jnp.tile(bn1_shift, L1)                             # (L1H,)

    # conv2 as two dense structured weights (even / odd pooled positions)
    Qe = np.zeros((L1, Lp, 3), np.float32)
    Qo = np.zeros((L1, Lp, 3), np.float32)
    for p in range(Lp):
        for k in range(3):
            Qe[2 * p + k, p, k] = 1.0
            Qo[2 * p + 1 + k, p, k] = 1.0
    w2 = params["conv2_w"]                                        # (H_out, H_in, 3)
    W2e = jnp.einsum("rpk,ock->rcpo", jnp.asarray(Qe), w2).reshape(L1H, LpH)
    W2o = jnp.einsum("rpk,ock->rcpo", jnp.asarray(Qo), w2).reshape(L1H, LpH)
    b2_base = jnp.tile(params["conv2_b"], Lp)                     # (LpH,)

    # fold BN1 into the downstream conv2 matmul (scale into rows, shift into bias)
    W2e_f = W2e * s1_full[:, None]
    W2o_f = W2o * s1_full[:, None]
    b2e = b2_base + t1_full @ W2e
    b2o = b2_base + t1_full @ W2o

    # fuse even/odd into one lane-padded concatenated weight (single matmul)
    W2cat = jnp.zeros((L1H, 2 * LpHp), f32)
    W2cat = W2cat.at[:, :LpH].set(W2e_f.astype(f32))
    W2cat = W2cat.at[:, LpHp:LpHp + LpH].set(W2o_f.astype(f32))
    b2cat = jnp.zeros((2 * LpHp,), f32)
    b2cat = b2cat.at[:LpH].set(b2e.astype(f32))
    b2cat = b2cat.at[LpHp:LpHp + LpH].set(b2o.astype(f32))

    # LSTM: fold PyTorch's channel-first flatten (B, C=H, L=Lp) into W_ih's rows,
    # then fold BN2 (eval) into the same matmul (scale rows, shift -> bias).
    wih_t = params["lstm_w_ih"].T                                 # rows indexed c*Lp + p
    wih_perm = wih_t.reshape(H, Lp, 4 * H).transpose(1, 0, 2).reshape(LpH, 4 * H)
    bn2_scale = params["bn2_gamma"] / jnp.sqrt(params["bn2_var"] + BN_EPS)
    bn2_shift = params["bn2_beta"] - params["bn2_mean"] * bn2_scale
    s2_full = jnp.tile(bn2_scale, Lp)                             # (LpH,)
    t2_full = jnp.tile(bn2_shift, Lp)                             # (LpH,)
    wih_f = wih_perm * s2_full[:, None]
    bg = (params["lstm_b_ih"] + params["lstm_b_hh"] + t2_full @ wih_perm).astype(f32)
    wih_pad = jnp.zeros((LpHp, 4 * H), f32).at[:LpH, :].set(wih_f.astype(f32))

    # hidden-to-hidden weight, all four gates in one 128-wide matmul
    whh = params["lstm_w_hh"].T.astype(f32)                       # (H, 4H) cols [i|f|g|o]

    # output head, zero-padded to a lane-dense (multiple-of-128) width
    wout_pad = jnp.zeros((H, A_pad), f32).at[:, :A].set(params["fc_out_w"].T)
    bout_pad = jnp.zeros((A_pad,), f32).at[:A].set(params["fc_out_b"])

    # pack every bias vector into one lane-aligned (1, TOTAL) array
    OFF_BIN = 0
    OFF_BG = OFF_BIN + _ceil128(H)
    OFF_BOUT = OFF_BG + _ceil128(4 * H)
    OFF_B1 = OFF_BOUT + _ceil128(A_pad)
    OFF_B2 = OFF_B1 + _ceil128(L1H)
    TOTAL = OFF_B2 + 2 * LpHp
    bias_pack = jnp.zeros((1, TOTAL), f32)
    bias_pack = bias_pack.at[0, OFF_BIN:OFF_BIN + H].set(b_in)
    bias_pack = bias_pack.at[0, OFF_BG:OFF_BG + 4 * H].set(bg)
    bias_pack = bias_pack.at[0, OFF_BOUT:OFF_BOUT + A_pad].set(bout_pad)
    bias_pack = bias_pack.at[0, OFF_B1:OFF_B1 + L1H].set(b1)
    bias_pack = bias_pack.at[0, OFF_B2:OFF_B2 + 2 * LpHp].set(b2cat)

    return dict(
        H=H, A=A, A_pad=A_pad, L1H=L1H, LpH=LpH, LpHp=LpHp,
        OFF_BIN=OFF_BIN, OFF_BG=OFF_BG, OFF_BOUT=OFF_BOUT,
        OFF_B1=OFF_B1, OFF_B2=OFF_B2,
        w_in_t=w_in_t, W1d=W1d, W2cat=W2cat, wih=wih_pad, whh=whh,
        wout=wout_pad, bias_pack=bias_pack,
    )


# ----------------------------- forward wrapper ------------------------------

def aconv_lstm_forward(prep, x, hx=None):
    B = x.shape[0]
    H = prep["H"]
    A = prep["A"]
    A_pad = prep["A_pad"]
    f32 = jnp.float32

    if hx is None:
        state0 = jnp.zeros((2, H), f32)
    else:
        # num_layers=1, single-direction LSTM (unbatched): hx[i] has shape (1, H)
        state0 = jnp.concatenate(
            [hx[0].reshape(1, H), hx[1].reshape(1, H)], axis=0).astype(f32)

    vmem = pl.BlockSpec(memory_space=pltpu.MemorySpace.VMEM)

    logits_pad, state = pl.pallas_call(
        _make_kernel(prep, B),
        out_shape=(
            jax.ShapeDtypeStruct((B, A_pad), f32),
            jax.ShapeDtypeStruct((2, H), f32),
        ),
        in_specs=[vmem] * 9,
        out_specs=(vmem, vmem),
    )(x.astype(f32),
      prep["w_in_t"], prep["W1d"], prep["W2cat"],
      prep["wih"], prep["whh"], prep["wout"],
      prep["bias_pack"], state0)

    return logits_pad[:, :A], (state[0:1, :], state[1:2, :])


# ------------------------------ parameters ----------------------------------

def init_params(key, obs, hidden, action):
    L1 = (hidden - 4) // 2 + 1
    Lp = (L1 - 2) // 2
    conv_out = hidden * Lp

    keys = jax.random.split(key, 20)

    def w(k, shape, scale=0.1):
        return scale * jax.random.normal(k, shape, jnp.float32)

    return dict(
        w_in=w(keys[0], (hidden, obs)),
        b_in=w(keys[1], (hidden,)),
        conv1_w=w(keys[2], (hidden, 1, 4)),
        conv1_b=w(keys[3], (hidden,)),
        bn1_gamma=1.0 + w(keys[4], (hidden,), 0.05),
        bn1_beta=w(keys[5], (hidden,), 0.05),
        bn1_mean=w(keys[6], (hidden,), 0.05),
        bn1_var=1.0 + jnp.abs(w(keys[7], (hidden,), 0.05)),
        conv2_w=w(keys[8], (hidden, hidden, 3)),
        conv2_b=w(keys[9], (hidden,)),
        bn2_gamma=1.0 + w(keys[10], (hidden,), 0.05),
        bn2_beta=w(keys[11], (hidden,), 0.05),
        bn2_mean=w(keys[12], (hidden,), 0.05),
        bn2_var=1.0 + jnp.abs(w(keys[13], (hidden,), 0.05)),
        lstm_w_ih=w(keys[14], (4 * hidden, conv_out)),
        lstm_w_hh=w(keys[15], (4 * hidden, hidden)),
        lstm_b_ih=w(keys[16], (4 * hidden,)),
        lstm_b_hh=w(keys[17], (4 * hidden,)),
        fc_out_w=w(keys[18], (action, hidden)),
        fc_out_b=w(keys[19], (action,)),
    )


if __name__ == "__main__":
    key = jax.random.PRNGKey(0)
    B, OBS, HIDDEN, ACTION = 4, 8, 32, 3   # small shapes; hidden must be even >= 8

    params = init_params(key, OBS, HIDDEN, ACTION)
    prep = prepare_params(params)          # one-time weight layout / BN folding
    x = jax.random.normal(jax.random.fold_in(key, 999), (B, OBS), jnp.float32)

    fwd = jax.jit(lambda xx: aconv_lstm_forward(prep, xx))
    logits, (h_n, c_n) = fwd(x)
    jax.block_until_ready((logits, h_n, c_n))

    assert logits.shape == (B, ACTION)
    assert h_n.shape == (1, HIDDEN) and c_n.shape == (1, HIDDEN)
    assert bool(jnp.all(jnp.isfinite(logits)))
    print("KERNEL_OK")
</pallas_src>

<mosaic_0001>
module attributes {stable_mosaic.version = 11 : i64} {
  func.func @kernel(%arg0: memref<4x8xf32, #tpu.memory_space<vmem>>, %arg1: memref<8x32xf32, #tpu.memory_space<vmem>>, %arg2: memref<32x480xf32, #tpu.memory_space<vmem>>, %arg3: memref<480x512xf32, #tpu.memory_space<vmem>>, %arg4: memref<256x128xf32, #tpu.memory_space<vmem>>, %arg5: memref<32x128xf32, #tpu.memory_space<vmem>>, %arg6: memref<32x128xf32, #tpu.memory_space<vmem>>, %arg7: memref<1x1408xf32, #tpu.memory_space<vmem>>, %arg8: memref<2x32xf32, #tpu.memory_space<vmem>>, %arg9: memref<4x128xf32, #tpu.memory_space<vmem>>, %arg10: memref<2x32xf32, #tpu.memory_space<vmem>>) attributes {dimension_semantics = [], scalar_prefetch = 0 : i64, scratch_operands = 0 : i64, tpu.core_type = #tpu.core_type<tc>} {
    %c0 = arith.constant 0 : index
    %c0_0 = arith.constant 0 : index
    %0 = vector.load %arg7[%c0, %c0_0] : memref<1x1408xf32, #tpu.memory_space<vmem>>, vector<1x32xf32>
    %c0_1 = arith.constant 0 : index
    %c128 = arith.constant 128 : index
    %1 = vector.load %arg7[%c0_1, %c128] : memref<1x1408xf32, #tpu.memory_space<vmem>>, vector<1x128xf32>
    %c0_2 = arith.constant 0 : index
    %c256 = arith.constant 256 : index
    %2 = vector.load %arg7[%c0_2, %c256] : memref<1x1408xf32, #tpu.memory_space<vmem>>, vector<1x128xf32>
    %c0_3 = arith.constant 0 : index
    %c384 = arith.constant 384 : index
    %3 = vector.load %arg7[%c0_3, %c384] : memref<1x1408xf32, #tpu.memory_space<vmem>>, vector<1x480xf32>
    %c0_4 = arith.constant 0 : index
    %c896 = arith.constant 896 : index
    %4 = vector.load %arg7[%c0_4, %c896] : memref<1x1408xf32, #tpu.memory_space<vmem>>, vector<1x512xf32>
    %c0_5 = arith.constant 0 : index
    %c0_6 = arith.constant 0 : index
    %5 = vector.load %arg0[%c0_5, %c0_6] : memref<4x8xf32, #tpu.memory_space<vmem>>, vector<4x8xf32>
    %c0_7 = arith.constant 0 : index
    %c0_8 = arith.constant 0 : index
    %6 = vector.load %arg1[%c0_7, %c0_8] : memref<8x32xf32, #tpu.memory_space<vmem>>, vector<8x32xf32>
    %cst = arith.constant dense<0.000000e+00> : vector<4x32xf32>
    %7 = tpu.matmul %5, %6, %cst {dimension_numbers = #tpu.dot_dimension_numbers<[1], [0], [0], [1], [0, 0, 1, 1], [], []>} : vector<4x8xf32>, vector<8x32xf32>, vector<4x32xf32> -> vector<4x32xf32>
    %8 = vector.broadcast %0 : vector<1x32xf32> to vector<4x32xf32>
    %9 = arith.addf %7, %8 : vector<4x32xf32>
    %cst_9 = arith.constant 0.000000e+00 : f32
    %10 = vector.broadcast %cst_9 : f32 to vector<4x32xf32>
    %11 = arith.cmpf oge, %9, %10 : vector<4x32xf32>
    %cst_10 = arith.constant 0.00999999977 : f32
    %12 = vector.broadcast %cst_10 : f32 to vector<4x32xf32>
    %13 = arith.mulf %12, %9 : vector<4x32xf32>
    %14 = arith.select %11, %9, %13 : vector<4x32xi1>, vector<4x32xf32>
    %c0_11 = arith.constant 0 : index
    %c0_12 = arith.constant 0 : index
    %15 = vector.load %arg2[%c0_11, %c0_12] : memref<32x480xf32, #tpu.memory_space<vmem>>, vector<32x480xf32>
    %cst_13 = arith.constant dense<0.000000e+00> : vector<4x480xf32>
    %16 = tpu.matmul %14, %15, %cst_13 {dimension_numbers = #tpu.dot_dimension_numbers<[1], [0], [0], [1], [0, 0, 1, 1], [], []>} : vector<4x32xf32>, vector<32x480xf32>, vector<4x480xf32> -> vector<4x480xf32>
    %17 = vector.broadcast %3 : vector<1x480xf32> to vector<4x480xf32>
    %18 = arith.addf %16, %17 : vector<4x480xf32>
    %cst_14 = arith.constant 0.000000e+00 : f32
    %19 = vector.broadcast %cst_14 : f32 to vector<4x480xf32>
    %20 = arith.cmpf oge, %18, %19 : vector<4x480xf32>
    %cst_15 = arith.constant 0.00999999977 : f32
    %21 = vector.broadcast %cst_15 : f32 to vector<4x480xf32>
    %22 = arith.mulf %21, %18 : vector<4x480xf32>
    %23 = arith.select %20, %18, %22 : vector<4x480xi1>, vector<4x480xf32>
    %c0_16 = arith.constant 0 : index
    %c0_17 = arith.constant 0 : index
    %24 = vector.load %arg3[%c0_16, %c0_17] : memref<480x512xf32, #tpu.memory_space<vmem>>, vector<480x512xf32>
    %cst_18 = arith.constant dense<0.000000e+00> : vector<4x512xf32>
    %25 = tpu.matmul %23, %24, %cst_18 {dimension_numbers = #tpu.dot_dimension_numbers<[1], [0], [0], [1], [0, 0, 1, 1], [], []>} : vector<4x480xf32>, vector<480x512xf32>, vector<4x512xf32> -> vector<4x512xf32>
    %26 = vector.broadcast %4 : vector<1x512xf32> to vector<4x512xf32>
    %27 = arith.addf %25, %26 : vector<4x512xf32>
    %28 = vector.extract_strided_slice %27 {offsets = [0, 0], sizes = [4, 256], strides = [1, 1]} : vector<4x512xf32> to vector<4x256xf32>
    %29 = vector.extract_strided_slice %27 {offsets = [0, 256], sizes = [4, 256], strides = [1, 1]} : vector<4x512xf32> to vector<4x256xf32>
    %30 = arith.maximumf %28, %29 : vector<4x256xf32>
    %cst_19 = arith.constant 0.000000e+00 : f32
    %31 = vector.broadcast %cst_19 : f32 to vector<4x256xf32>
    %32 = arith.cmpf oge, %30, %31 : vector<4x256xf32>
    %cst_20 = arith.constant 0.00999999977 : f32
    %33 = vector.broadcast %cst_20 : f32 to vector<4x256xf32>
    %34 = arith.mulf %33, %30 : vector<4x256xf32>
    %35 = arith.select %32, %30, %34 : vector<4x256xi1>, vector<4x256xf32>
    %c0_21 = arith.constant 0 : index
    %c0_22 = arith.constant 0 : index
    %36 = vector.load %arg4[%c0_21, %c0_22] : memref<256x128xf32, #tpu.memory_space<vmem>>, vector<256x128xf32>
    %cst_23 = arith.constant dense<0.000000e+00> : vector<4x128xf32>
    %37 = tpu.matmul %35, %36, %cst_23 {dimension_numbers = #tpu.dot_dimension_numbers<[1], [0], [0], [1], [0, 0, 1, 1], [], []>} : vector<4x256xf32>, vector<256x128xf32>, vector<4x128xf32> -> vector<4x128xf32>
    %38 = vector.broadcast %1 : vector<1x128xf32> to vector<4x128xf32>
    %39 = arith.addf %37, %38 : vector<4x128xf32>
    %c0_24 = arith.constant 0 : index
    %c0_25 = arith.constant 0 : index
    %40 = vector.load %arg5[%c0_24, %c0_25] : memref<32x128xf32, #tpu.memory_space<vmem>>, vector<32x128xf32>
    %c0_26 = arith.constant 0 : index
    %c0_27 = arith.constant 0 : index
    %41 = vector.load %arg8[%c0_26, %c0_27] : memref<2x32xf32, #tpu.memory_space<vmem>>, vector<1x32xf32>
    %c1 = arith.constant 1 : index
    %c0_28 = arith.constant 0 : index
    %42 = vector.load %arg8[%c1, %c0_28] : memref<2x32xf32, #tpu.memory_space<vmem>>, vector<1x32xf32>
    %43 = vector.extract_strided_slice %39 {offsets = [0, 0], sizes = [1, 128], strides = [1, 1]} : vector<4x128xf32> to vector<1x128xf32>
    %cst_29 = arith.constant dense<0.000000e+00> : vector<1x128xf32>
    %44 = tpu.matmul %41, %40, %cst_29 {dimension_numbers = #tpu.dot_dimension_numbers<[1], [0], [0], [1], [0, 0, 1, 1], [], []>} : vector<1x32xf32>, vector<32x128xf32>, vector<1x128xf32> -> vector<1x128xf32>
    %45 = arith.addf %43, %44 : vector<1x128xf32>
    %46 = vector.extract_strided_slice %45 {offsets = [0, 0], sizes = [1, 32], strides = [1, 1]} : vector<1x128xf32> to vector<1x32xf32>
    %47 = arith.negf %46 : vector<1x32xf32>
    %48 = math.exp %47 : vector<1x32xf32>
    %cst_30 = arith.constant 1.000000e+00 : f32
    %49 = vector.broadcast %cst_30 : f32 to vector<1x32xf32>
    %50 = arith.addf %49, %48 : vector<1x32xf32>
    %51 = arith.divf %49, %50 : vector<1x32xf32>
    %52 = vector.extract_strided_slice %45 {offsets = [0, 32], sizes = [1, 32], strides = [1, 1]} : vector<1x128xf32> to vector<1x32xf32>
    %53 = arith.negf %52 : vector<1x32xf32>
    %54 = math.exp %53 : vector<1x32xf32>
    %cst_31 = arith.constant 1.000000e+00 : f32
    %55 = vector.broadcast %cst_31 : f32 to vector<1x32xf32>
    %56 = arith.addf %55, %54 : vector<1x32xf32>
    %57 = arith.divf %55, %56 : vector<1x32xf32>
    %58 = vector.extract_strided_slice %45 {offsets = [0, 64], sizes = [1, 32], strides = [1, 1]} : vector<1x128xf32> to vector<1x32xf32>
    %59 = math.tanh %58 : vector<1x32xf32>
    %60 = vector.extract_strided_slice %45 {offsets = [0, 96], sizes = [1, 32], strides = [1, 1]} : vector<1x128xf32> to vector<1x32xf32>
    %61 = arith.negf %60 : vector<1x32xf32>
    %62 = math.exp %61 : vector<1x32xf32>
    %cst_32 = arith.constant 1.000000e+00 : f32
    %63 = vector.broadcast %cst_32 : f32 to vector<1x32xf32>
    %64 = arith.addf %63, %62 : vector<1x32xf32>
    %65 = arith.divf %63, %64 : vector<1x32xf32>
    %66 = arith.mulf %57, %42 : vector<1x32xf32>
    %67 = arith.mulf %51, %59 : vector<1x32xf32>
    %68 = arith.addf %66, %67 : vector<1x32xf32>
    %69 = math.tanh %68 : vector<1x32xf32>
    %70 = arith.mulf %65, %69 : vector<1x32xf32>
    %71 = vector.extract_strided_slice %39 {offsets = [1, 0], sizes = [1, 128], strides = [1, 1]} : vector<4x128xf32> to vector<1x128xf32>
    %cst_33 = arith.constant dense<0.000000e+00> : vector<1x128xf32>
    %72 = tpu.matmul %70, %40, %cst_33 {dimension_numbers = #tpu.dot_dimension_numbers<[1], [0], [0], [1], [0, 0, 1, 1], [], []>} : vector<1x32xf32>, vector<32x128xf32>, vector<1x128xf32> -> vector<1x128xf32>
    %73 = arith.addf %71, %72 : vector<1x128xf32>
    %74 = vector.extract_strided_slice %73 {offsets = [0, 0], sizes = [1, 32], strides = [1, 1]} : vector<1x128xf32> to vector<1x32xf32>
    %75 = arith.negf %74 : vector<1x32xf32>
    %76 = math.exp %75 : vector<1x32xf32>
    %cst_34 = arith.constant 1.000000e+00 : f32
    %77 = vector.broadcast %cst_34 : f32 to vector<1x32xf32>
    %78 = arith.addf %77, %76 : vector<1x32xf32>
    %79 = arith.divf %77, %78 : vector<1x32xf32>
    %80 = vector.extract_strided_slice %73 {offsets = [0, 32], sizes = [1, 32], strides = [1, 1]} : vector<1x128xf32> to vector<1x32xf32>
    %81 = arith.negf %80 : vector<1x32xf32>
    %82 = math.exp %81 : vector<1x32xf32>
    %cst_35 = arith.constant 1.000000e+00 : f32
    %83 = vector.broadcast %cst_35 : f32 to vector<1x32xf32>
    %84 = arith.addf %83, %82 : vector<1x32xf32>
    %85 = arith.divf %83, %84 : vector<1x32xf32>
    %86 = vector.extract_strided_slice %73 {offsets = [0, 64], sizes = [1, 32], strides = [1, 1]} : vector<1x128xf32> to vector<1x32xf32>
    %87 = math.tanh %86 : vector<1x32xf32>
    %88 = vector.extract_strided_slice %73 {offsets = [0, 96], sizes = [1, 32], strides = [1, 1]} : vector<1x128xf32> to vector<1x32xf32>
    %89 = arith.negf %88 : vector<1x32xf32>
    %90 = math.exp %89 : vector<1x32xf32>
    %cst_36 = arith.constant 1.000000e+00 : f32
    %91 = vector.broadcast %cst_36 : f32 to vector<1x32xf32>
    %92 = arith.addf %91, %90 : vector<1x32xf32>
    %93 = arith.divf %91, %92 : vector<1x32xf32>
    %94 = arith.mulf %85, %68 : vector<1x32xf32>
    %95 = arith.mulf %79, %87 : vector<1x32xf32>
    %96 = arith.addf %94, %95 : vector<1x32xf32>
    %97 = math.tanh %96 : vector<1x32xf32>
    %98 = arith.mulf %93, %97 : vector<1x32xf32>
    %99 = vector.extract_strided_slice %39 {offsets = [2, 0], sizes = [1, 128], strides = [1, 1]} : vector<4x128xf32> to vector<1x128xf32>
    %cst_37 = arith.constant dense<0.000000e+00> : vector<1x128xf32>
    %100 = tpu.matmul %98, %40, %cst_37 {dimension_numbers = #tpu.dot_dimension_numbers<[1], [0], [0], [1], [0, 0, 1, 1], [], []>} : vector<1x32xf32>, vector<32x128xf32>, vector<1x128xf32> -> vector<1x128xf32>
    %101 = arith.addf %99, %100 : vector<1x128xf32>
    %102 = vector.extract_strided_slice %101 {offsets = [0, 0], sizes = [1, 32], strides = [1, 1]} : vector<1x128xf32> to vector<1x32xf32>
    %103 = arith.negf %102 : vector<1x32xf32>
    %104 = math.exp %103 : vector<1x32xf32>
    %cst_38 = arith.constant 1.000000e+00 : f32
    %105 = vector.broadcast %cst_38 : f32 to vector<1x32xf32>
    %106 = arith.addf %105, %104 : vector<1x32xf32>
    %107 = arith.divf %105, %106 : vector<1x32xf32>
    %108 = vector.extract_strided_slice %101 {offsets = [0, 32], sizes = [1, 32], strides = [1, 1]} : vector<1x128xf32> to vector<1x32xf32>
    %109 = arith.negf %108 : vector<1x32xf32>
    %110 = math.exp %109 : vector<1x32xf32>
    %cst_39 = arith.constant 1.000000e+00 : f32
    %111 = vector.broadcast %cst_39 : f32 to vector<1x32xf32>
    %112 = arith.addf %111, %110 : vector<1x32xf32>
    %113 = arith.divf %111, %112 : vector<1x32xf32>
    %114 = vector.extract_strided_slice %101 {offsets = [0, 64], sizes = [1, 32], strides = [1, 1]} : vector<1x128xf32> to vector<1x32xf32>
    %115 = math.tanh %114 : vector<1x32xf32>
    %116 = vector.extract_strided_slice %101 {offsets = [0, 96], sizes = [1, 32], strides = [1, 1]} : vector<1x128xf32> to vector<1x32xf32>
    %117 = arith.negf %116 : vector<1x32xf32>
    %118 = math.exp %117 : vector<1x32xf32>
    %cst_40 = arith.constant 1.000000e+00 : f32
    %119 = vector.broadcast %cst_40 : f32 to vector<1x32xf32>
    %120 = arith.addf %119, %118 : vector<1x32xf32>
    %121 = arith.divf %119, %120 : vector<1x32xf32>
    %122 = arith.mulf %113, %96 : vector<1x32xf32>
    %123 = arith.mulf %107, %115 : vector<1x32xf32>
    %124 = arith.addf %122, %123 : vector<1x32xf32>
    %125 = math.tanh %124 : vector<1x32xf32>
    %126 = arith.mulf %121, %125 : vector<1x32xf32>
    %127 = vector.extract_strided_slice %39 {offsets = [3, 0], sizes = [1, 128], strides = [1, 1]} : vector<4x128xf32> to vector<1x128xf32>
    %cst_41 = arith.constant dense<0.000000e+00> : vector<1x128xf32>
    %128 = tpu.matmul %126, %40, %cst_41 {dimension_numbers = #tpu.dot_dimension_numbers<[1], [0], [0], [1], [0, 0, 1, 1], [], []>} : vector<1x32xf32>, vector<32x128xf32>, vector<1x128xf32> -> vector<1x128xf32>
    %129 = arith.addf %127, %128 : vector<1x128xf32>
    %130 = vector.extract_strided_slice %129 {offsets = [0, 0], sizes = [1, 32], strides = [1, 1]} : vector<1x128xf32> to vector<1x32xf32>
    %131 = arith.negf %130 : vector<1x32xf32>
    %132 = math.exp %131 : vector<1x32xf32>
    %cst_42 = arith.constant 1.000000e+00 : f32
    %133 = vector.broadcast %cst_42 : f32 to vector<1x32xf32>
    %134 = arith.addf %133, %132 : vector<1x32xf32>
    %135 = arith.divf %133, %134 : vector<1x32xf32>
    %136 = vector.extract_strided_slice %129 {offsets = [0, 32], sizes = [1, 32], strides = [1, 1]} : vector<1x128xf32> to vector<1x32xf32>
    %137 = arith.negf %136 : vector<1x32xf32>
    %138 = math.exp %137 : vector<1x32xf32>
    %cst_43 = arith.constant 1.000000e+00 : f32
    %139 = vector.broadcast %cst_43 : f32 to vector<1x32xf32>
    %140 = arith.addf %139, %138 : vector<1x32xf32>
    %141 = arith.divf %139, %140 : vector<1x32xf32>
    %142 = vector.extract_strided_slice %129 {offsets = [0, 64], sizes = [1, 32], strides = [1, 1]} : vector<1x128xf32> to vector<1x32xf32>
    %143 = math.tanh %142 : vector<1x32xf32>
    %144 = vector.extract_strided_slice %129 {offsets = [0, 96], sizes = [1, 32], strides = [1, 1]} : vector<1x128xf32> to vector<1x32xf32>
    %145 = arith.negf %144 : vector<1x32xf32>
    %146 = math.exp %145 : vector<1x32xf32>
    %cst_44 = arith.constant 1.000000e+00 : f32
    %147 = vector.broadcast %cst_44 : f32 to vector<1x32xf32>
    %148 = arith.addf %147, %146 : vector<1x32xf32>
    %149 = arith.divf %147, %148 : vector<1x32xf32>
    %150 = arith.mulf %141, %124 : vector<1x32xf32>
    %151 = arith.mulf %135, %143 : vector<1x32xf32>
    %152 = arith.addf %150, %151 : vector<1x32xf32>
    %153 = math.tanh %152 : vector<1x32xf32>
    %154 = arith.mulf %149, %153 : vector<1x32xf32>
    %155 = tpu.concatenate %70, %98, %126, %154 in 0 : vector<1x32xf32>, vector<1x32xf32>, vector<1x32xf32>, vector<1x32xf32> -> vector<4x32xf32>
    %cst_45 = arith.constant 0.000000e+00 : f32
    %156 = vector.broadcast %cst_45 : f32 to vector<4x32xf32>
    %157 = arith.cmpf oge, %155, %156 : vector<4x32xf32>
    %cst_46 = arith.constant 0.00999999977 : f32
    %158 = vector.broadcast %cst_46 : f32 to vector<4x32xf32>
    %159 = arith.mulf %158, %155 : vector<4x32xf32>
    %160 = arith.select %157, %155, %159 : vector<4x32xi1>, vector<4x32xf32>
    %c0_47 = arith.constant 0 : index
    %c0_48 = arith.constant 0 : index
    %161 = vector.load %arg6[%c0_47, %c0_48] : memref<32x128xf32, #tpu.memory_space<vmem>>, vector<32x128xf32>
    %cst_49 = arith.constant dense<0.000000e+00> : vector<4x128xf32>
    %162 = tpu.matmul %160, %161, %cst_49 {dimension_numbers = #tpu.dot_dimension_numbers<[1], [0], [0], [1], [0, 0, 1, 1], [], []>} : vector<4x32xf32>, vector<32x128xf32>, vector<4x128xf32> -> vector<4x128xf32>
    %163 = vector.broadcast %2 : vector<1x128xf32> to vector<4x128xf32>
    %164 = arith.addf %162, %163 : vector<4x128xf32>
    %c0_50 = arith.constant 0 : index
    %c0_51 = arith.constant 0 : index
    %165 = vector.load %arg9[%c0_50, %c0_51] : memref<4x128xf32, #tpu.memory_space<vmem>>, vector<4x128xf32>
    tpu.vector_store %arg9[%c0_50, %c0_51], %164 {strides = array<i32>} : memref<4x128xf32, #tpu.memory_space<vmem>>, vector<4x128xf32>,
    %166 = tpu.concatenate %154, %152 in 0 : vector<1x32xf32>, vector<1x32xf32> -> vector<2x32xf32>
    %c0_52 = arith.constant 0 : index
    %c0_53 = arith.constant 0 : index
    %167 = vector.load %arg10[%c0_52, %c0_53] : memref<2x32xf32, #tpu.memory_space<vmem>>, vector<2x32xf32>
    tpu.vector_store %arg10[%c0_52, %c0_53], %166 {strides = array<i32>} : memref<2x32xf32, #tpu.memory_space<vmem>>, vector<2x32xf32>,
    return
  }
}

</mosaic_0001>

<llo_original>
// kernel: _lambda_.1
$region0: #{_lambda_.1}
  #allocation0 [shape = 'u32[]', space=smem, size = 0x4, offset = 0x4, fixed_abs, tag = 'smem constant byte address 0x4 - core index']
  #allocation1 [shape = 'u32[144,128]{1,0:T(1,128)}', space=vmem, size = 0x12000, scoped, tag = 'internal scratch']
  %s0 = inlined_call_operand.hbm [shape: f32[4,8], index: 0, kind: input, shape index: {}]
  %s1 = inlined_call_operand.vmem [shape: f32[8,32], index: 1, kind: input, shape index: {}]
  %s2 = inlined_call_operand.hbm [shape: f32[32,480], index: 2, kind: input, shape index: {}]
  %s3 = inlined_call_operand.hbm [shape: f32[480,512], index: 3, kind: input, shape index: {}]
  %s4 = inlined_call_operand.hbm [shape: f32[256,128], index: 4, kind: input, shape index: {}]
  %s5 = inlined_call_operand.hbm [shape: f32[32,128], index: 5, kind: input, shape index: {}]
  %s6 = inlined_call_operand.hbm [shape: f32[32,128], index: 6, kind: input, shape index: {}]
  %s7 = inlined_call_operand.vmem [shape: f32[1,1408], index: 7, kind: input, shape index: {}]
  %s8 = inlined_call_operand.vmem [shape: f32[2,32], index: 8, kind: input, shape index: {}]
  %s9 = inlined_call_operand.hbm [shape: f32[4,128], index: 9, kind: output, shape index: {0}]
  %s10 = inlined_call_operand.vmem [shape: f32[2,32], index: 10, kind: output, shape index: {1}]
  %11 = xla_tuple %s9, %s10
  %s12 = sld [smem:[#allocation0]]
  $region78: #{_lambda_.1} parent=0
    _
  %s14 = ssub.s32 1, %s12
  %s15 = scalar_select 0, %s14, %s12
  $region1: #{_lambda_.1} parent=0
    #allocation2 [shape = 'u8[2048]{0}', space=vmem, size = 0x800, scoped, tag = 'input window, operand 0, single buffered']
    #allocation3 [shape = 's32[1]{0}', space=sflag, size = 0x4, scoped, tag = 'scoped memory for _lambda_.1']
    #allocation4 [shape = 's32[1]{0}', space=sflag, size = 0x4, scoped, tag = 'scoped memory for _lambda_.1']
    #allocation5 [shape = 'u8[65536]{0}', space=vmem, size = 0x10000, scoped, tag = 'input window, operand 2, single buffered']
    #allocation6 [shape = 's32[1]{0}', space=sflag, size = 0x4, scoped, tag = 'scoped memory for _lambda_.1']
    #allocation7 [shape = 'u8[983040]{0}', space=vmem, size = 0xf0000, scoped, tag = 'input window, operand 3, single buffered']
    #allocation8 [shape = 'u8[131072]{0}', space=vmem, size = 0x20000, scoped, tag = 'input window, operand 4, single buffered']
    #allocation9 [shape = 's32[1]{0}', space=sflag, size = 0x4, scoped, tag = 'scoped memory for _lambda_.1']
    #allocation10 [shape = 'u8[16384]{0}', space=vmem, size = 0x4000, scoped, tag = 'input window, operand 5, single buffered']
    #allocation11 [shape = 'u8[16384]{0}', space=vmem, size = 0x4000, scoped, tag = 'input window, operand 6, single buffered']
    #allocation12 [shape = 's32[1]{0}', space=sflag, size = 0x4, scoped, tag = 'scoped memory for _lambda_.1']
    #allocation13 [shape = 'u8[2048]{0}', space=vmem, size = 0x800, scoped, tag = 'output window, operand 0, single buffered']
    %16 = vsyncpa [#allocation3], 0
    %17 = vsyncpa [#allocation6], 0
    %18 = vsyncpa [#allocation9], 0
    %19 = vsyncpa [#allocation12], 0
    %20 = vsyncpa [#allocation4], 0
    // Predicated region
    $region2: #{_lambda_.1} parent=1 // pred_check
      _
    $region3: #{_lambda_.1} parent=1 // pred_check_branch
      %22 = sbr.rel (0) target = $region5
    $region4: #{_lambda_.1} parent=1 // pred_region
      %s24 = ssub.s32 64, 64
      %25 = vsyncadd [#allocation3], %s24
      %s27 = sshll.u32 [#allocation2], 4
      %s28 = int_to_ptr.vmem [resolvable:$true] %s27
      %30 = dma.hbm_to_vmem [thread:$0]  %s0, 64, %s28, [#allocation3]
    $region5: #{_lambda_.1} parent=1 // pred_fallthru
      _
    // Predicated region
    $region6: #{_lambda_.1} parent=1 // pred_check
      _
    $region7: #{_lambda_.1} parent=1 // pred_check_branch
      %32 = sbr.rel (0) target = $region9
    $region8: #{_lambda_.1} parent=1 // pred_region
      _
    $region9: #{_lambda_.1} parent=1 // pred_fallthru
      _
    // Predicated region
    $region10: #{_lambda_.1} parent=1 // pred_check
      _
    $region11: #{_lambda_.1} parent=1 // pred_check_branch
      %34 = sbr.rel (0) target = $region13
    $region12: #{_lambda_.1} parent=1 // pred_region
      %s36 = ssub.s32 2048, 2048
      %37 = vsyncadd [#allocation6], %s36
      %s38 = sshll.u32 [#allocation5], 4
      %s39 = int_to_ptr.vmem [resolvable:$true] %s38
      %44 = dma.hbm_to_vmem [thread:$0]  %s2, 2048, %s39, [#allocation6], 512, 512, 32
    $region13: #{_lambda_.1} parent=1 // pred_fallthru
      _
    // Predicated region
    $region14: #{_lambda_.1} parent=1 // pred_check
      _
    $region15: #{_lambda_.1} parent=1 // pred_check_branch
      %46 = sbr.rel (0) target = $region17
    $region16: #{_lambda_.1} parent=1 // pred_region
      %s48 = ssub.s32 30720, 30720
      %49 = vsyncadd [#allocation6], %s48
      %s50 = sshll.u32 [#allocation7], 4
      %s51 = int_to_ptr.vmem [resolvable:$true] %s50
      %56 = dma.hbm_to_vmem [thread:$0]  %s3, 30720, %s51, [#allocation6], 512, 512, 32
    $region17: #{_lambda_.1} parent=1 // pred_fallthru
      _
    // Predicated region
    $region18: #{_lambda_.1} parent=1 // pred_check
      _
    $region19: #{_lambda_.1} parent=1 // pred_check_branch
      %58 = sbr.rel (0) target = $region21
    $region20: #{_lambda_.1} parent=1 // pred_region
      %s60 = ssub.s32 4096, 4096
      %61 = vsyncadd [#allocation9], %s60
      %s62 = sshll.u32 [#allocation8], 4
      %s63 = int_to_ptr.vmem [resolvable:$true] %s62
      %68 = dma.hbm_to_vmem [thread:$0]  %s4, 4096, %s63, [#allocation9], 128, 128, 8
    $region21: #{_lambda_.1} parent=1 // pred_fallthru
      _
    // Predicated region
    $region22: #{_lambda_.1} parent=1 // pred_check
      _
    $region23: #{_lambda_.1} parent=1 // pred_check_branch
      %70 = sbr.rel (0) target = $region25
    $region24: #{_lambda_.1} parent=1 // pred_region
      %s72 = ssub.s32 512, 512
      %73 = vsyncadd [#allocation9], %s72
      %s74 = sshll.u32 [#allocation10], 4
      %s75 = int_to_ptr.vmem [resolvable:$true] %s74
      %80 = dma.hbm_to_vmem [thread:$0]  %s5, 512, %s75, [#allocation9], 128, 128, 8
    $region25: #{_lambda_.1} parent=1 // pred_fallthru
      _
    // Predicated region
    $region26: #{_lambda_.1} parent=1 // pred_check
      _
    $region27: #{_lambda_.1} parent=1 // pred_check_branch
      %82 = sbr.rel (0) target = $region29
    $region28: #{_lambda_.1} parent=1 // pred_region
      %s84 = ssub.s32 512, 512
      %85 = vsyncadd [#allocation12], %s84
      %s86 = sshll.u32 [#allocation11], 4
      %s87 = int_to_ptr.vmem [resolvable:$true] %s86
      %92 = dma.hbm_to_vmem [thread:$0]  %s6, 512, %s87, [#allocation12], 128, 128, 8
    $region29: #{_lambda_.1} parent=1 // pred_fallthru
      _
    // Predicated region
    $region30: #{_lambda_.1} parent=1 // pred_check
      _
    $region31: #{_lambda_.1} parent=1 // pred_check_branch
      %94 = sbr.rel (0) target = $region33
    $region32: #{_lambda_.1} parent=1 // pred_region
      _
    $region33: #{_lambda_.1} parent=1 // pred_fallthru
      _
    // Predicated region
    $region34: #{_lambda_.1} parent=1 // pred_check
      _
    $region35: #{_lambda_.1} parent=1 // pred_check_branch
      %96 = sbr.rel (0) target = $region37
    $region36: #{_lambda_.1} parent=1 // pred_region
      _
    $region37: #{_lambda_.1} parent=1 // pred_fallthru
      _
    // Predicated region
    $region38: #{_lambda_.1} parent=1 // pred_check
      _
    $region39: #{_lambda_.1} parent=1 // pred_check_branch
      %98 = sbr.rel (0) target = $region41
    $region40: #{_lambda_.1} parent=1 // pred_region
      %99 = dma.done [#allocation3], 64
    $region41: #{_lambda_.1} parent=1 // pred_fallthru
      _
    // Predicated region
    $region42: #{_lambda_.1} parent=1 // pred_check
      _
    $region43: #{_lambda_.1} parent=1 // pred_check_branch
      %101 = sbr.rel (0) target = $region45
    $region44: #{_lambda_.1} parent=1 // pred_region
      %102 = dma.done [#allocation6], 2048
    $region45: #{_lambda_.1} parent=1 // pred_fallthru
      _
    // Predicated region
    $region46: #{_lambda_.1} parent=1 // pred_check
      _
    $region47: #{_lambda_.1} parent=1 // pred_check_branch
      %104 = sbr.rel (0) target = $region49
    $region48: #{_lambda_.1} parent=1 // pred_region
      %105 = dma.done [#allocation6], 30720
    $region49: #{_lambda_.1} parent=1 // pred_fallthru
      _
    // Predicated region
    $region50: #{_lambda_.1} parent=1 // pred_check
      _
    $region51: #{_lambda_.1} parent=1 // pred_check_branch
      %107 = sbr.rel (0) target = $region53
    $region52: #{_lambda_.1} parent=1 // pred_region
      %108 = dma.done [#allocation9], 4096
    $region53: #{_lambda_.1} parent=1 // pred_fallthru
      _
    // Predicated region
    $region54: #{_lambda_.1} parent=1 // pred_check
      _
    $region55: #{_lambda_.1} parent=1 // pred_check_branch
      %110 = sbr.rel (0) target = $region57
    $region56: #{_lambda_.1} parent=1 // pred_region
      %111 = dma.done [#allocation9], 512
    $region57: #{_lambda_.1} parent=1 // pred_fallthru
      _
    // Predicated region
    $region58: #{_lambda_.1} parent=1 // pred_check
      _
    $region59: #{_lambda_.1} parent=1 // pred_check_branch
      %113 = sbr.rel (0) target = $region61
    $region60: #{_lambda_.1} parent=1 // pred_region
      %114 = dma.done [#allocation12], 512
    $region61: #{_lambda_.1} parent=1 // pred_fallthru
      _
    %v115 = vld [vmem:[%s7] sm:$0x1]
    %v116 = vld [vmem:[%s7 + $0x1] sm:$0x1]
    %v117 = vld [vmem:[%s7 + $0x2] sm:$0x1]
    %v118 = vld [vmem:[%s7 + $0x3] sm:$0xf]
    %v119 = vld [vmem:[%s7 + $0x7] sm:$0xf]
    %v120 = vld [vmem:[#allocation2] sm:$0xf]
    %v121 = vld [vmem:[%s1] sm:$0xff]
    %v123 = vlaneseq
    %v124 = vshrl.u32 %v123, 7
    %v125 = vsub.s32 0, %v124
    %v126 = vrot.slane %v115, %v125
    %vm128 = vcmask 64512
    %v130 = vsel %vm128, %v120, 0
    %132 = vmatprep.subr.mxu0 0.0
    %133 = vmatpush1.msra.mxu0 %v121
    %134 = vmatprep.subr.mxu0 0.0
    %135 = vmatpush1.msra.mxu0 0.0
    %136 = vmatprep.subr.mxu0 0.0
    %137 = vmatpush1.msra.mxu0 0.0
    %138 = vmatprep.subr.mxu0 0.0
    %139 = vmatpush1.msra.mxu0 0.0
    %140 = vmatprep.subr.mxu0 0.0
    %141 = vmatpush1.msra.mxu0 0.0
    %142 = vmatprep.subr.mxu0 0.0
    %143 = vmatpush1.msra.mxu0 0.0
    %144 = vmatprep.subr.mxu0 0.0
    %145 = vmatpush1.msra.mxu0 0.0
    %146 = vmatprep.subr.mxu0 0.0
    %147 = vmatpush1.msra.mxu0 0.0
    %148 = vmatprep.subr.mxu0 0.0
    %149 = vmatpush1.msra.mxu0 0.0
    %150 = vmatprep.subr.mxu0 0.0
    %151 = vmatpush1.msra.mxu0 0.0
    %152 = vmatprep.subr.mxu0 0.0
    %153 = vmatpush1.msra.mxu0 0.0
    %154 = vmatprep.subr.mxu0 0.0
    %155 = vmatpush1.msra.mxu0 0.0
    %156 = vmatprep.subr.mxu0 0.0
    %157 = vmatpush1.msra.mxu0 0.0
    %158 = vmatprep.subr.mxu0 0.0
    %159 = vmatpush1.msra.mxu0 0.0
    %160 = vmatprep.subr.mxu0 0.0
    %161 = vmatpush1.msra.mxu0 0.0
    %162 = vmatprep.subr.mxu0 0.0
    %163 = vmatpush1.msra.mxu0 0.0
    %164 = vmatprep.subr.mxu0 0.0
    %165 = vmatpush1.msra.mxu0 0.0
    %166 = vmatprep.subr.mxu0 0.0
    %167 = vmatpush1.msra.mxu0 0.0
    %168 = vmatprep.subr.mxu0 0.0
    %169 = vmatpush1.msra.mxu0 0.0
    %170 = vmatprep.subr.mxu0 0.0
    %171 = vmatpush1.msra.mxu0 0.0
    %172 = vmatprep.subr.mxu0 0.0
    %173 = vmatpush1.msra.mxu0 0.0
    %174 = vmatprep.subr.mxu0 0.0
    %175 = vmatpush1.msra.mxu0 0.0
    %176 = vmatprep.subr.mxu0 0.0
    %177 = vmatpush1.msra.mxu0 0.0
    %178 = vmatprep.subr.mxu0 0.0
    %179 = vmatpush1.msra.mxu0 0.0
    %180 = vmatprep.subr.mxu0 0.0
    %181 = vmatpush1.msra.mxu0 0.0
    %182 = vmatprep.subr.mxu0 0.0
    %183 = vmatpush1.msra.mxu0 0.0
    %184 = vmatprep.subr.mxu0 0.0
    %185 = vmatpush1.msra.mxu0 0.0
    %186 = vmatprep.subr.mxu0 0.0
    %187 = vmatpush1.msra.mxu0 0.0
    %188 = vmatprep.subr.mxu0 0.0
    %189 = vmatpush1.msra.mxu0 0.0
    %190 = vmatprep.subr.mxu0 0.0
    %191 = vmatpush1.msra.mxu0 0.0
    %192 = vmatprep.subr.mxu0 0.0
    %193 = vmatpush1.msra.mxu0 0.0
    %194 = vmatprep.subr.mxu0 0.0
    %195 = vmatpush1.msra.mxu0 0.0
    %196 = vmatprep.mubr.f32.mxu0 0.0
    %197 = vmatmul.mubr.f32.gmra.mrb[0].mxu0 %v130
    %v198 = vpop.f32.mrb[0].mxu0
    %v199 = vadd.f32 %v126, %v198
    %v200 = vpop.f32.mrb[0].mxu0
    %201 = vdwg.mxu0
    %vm202 = vcmp.ge.f32.partialorder %v199, 0.0
    %v203 = vmul.f32 %v199, 0.01
    %v204 = vsel %vm202, %v199, %v203
    %v205 = vld [vmem:[#allocation5] sm:$0xff]
    %v206 = vld [vmem:[#allocation5 + $0x8] sm:$0xff]
    %v207 = vld [vmem:[#allocation5 + $0x10] sm:$0xff]
    %v208 = vld [vmem:[#allocation5 + $0x18] sm:$0xff]
    %v209 = vld [vmem:[#allocation5 + $0x20] sm:$0xff]
    %v210 = vld [vmem:[#allocation5 + $0x28] sm:$0xff]
    %v211 = vld [vmem:[#allocation5 + $0x30] sm:$0xff]
    %v212 = vld [vmem:[#allocation5 + $0x38] sm:$0xff]
    %v213 = vld [vmem:[#allocation5 + $0x40] sm:$0xff]
    %v214 = vld [vmem:[#allocation5 + $0x48] sm:$0xff]
    %v215 = vld [vmem:[#allocation5 + $0x50] sm:$0xff]
    %v216 = vld [vmem:[#allocation5 + $0x58] sm:$0xff]
    %v217 = vld [vmem:[#allocation5 + $0x60] sm:$0xff]
    %v218 = vld [vmem:[#allocation5 + $0x68] sm:$0xff]
    %v219 = vld [vmem:[#allocation5 + $0x70] sm:$0xff]
    %v220 = vld [vmem:[#allocation5 + $0x78] sm:$0xff]
    %v222 = vlaneseq
    %v223 = vshrl.u32 %v222, 7
    %v224 = vsub.s32 0, %v223
    %v225 = vrot.slane %v118, %v224
    %v226 = vlaneseq
    %v227 = vshrl.u32 %v226, 7
    %v228 = vsub.s32 1, %v227
    %v229 = vrot.slane %v118, %v228
    %v230 = vlaneseq
    %v231 = vshrl.u32 %v230, 7
    %v232 = vsub.s32 2, %v231
    %v233 = vrot.slane %v118, %v232
    %v234 = vlaneseq
    %v235 = vshrl.u32 %v234, 7
    %v236 = vsub.s32 3, %v235
    %v237 = vrot.slane %v118, %v236
    %vm242 = vcmask 261120
    %v244 = vsel %vm242, %v204, 0
    %246 = vmatprep.subr.mxu0 %v206
    %247 = vmatpush1.msra.mxu0 %v205
    %248 = vmatprep.subr.mxu0 %v210
    %249 = vmatpush1.msra.mxu0 %v209
    %250 = vmatprep.subr.mxu0 %v214
    %251 = vmatpush1.msra.mxu0 %v213
    %252 = vmatprep.subr.mxu0 %v218
    %253 = vmatpush1.msra.mxu0 %v217
    %254 = vmatprep.subr.mxu0 0.0
    %255 = vmatpush1.msra.mxu0 0.0
    %256 = vmatprep.subr.mxu0 0.0
    %257 = vmatpush1.msra.mxu0 0.0
    %258 = vmatprep.subr.mxu0 0.0
    %259 = vmatpush1.msra.mxu0 0.0
    %260 = vmatprep.subr.mxu0 0.0
    %261 = vmatpush1.msra.mxu0 0.0
    %262 = vmatprep.subr.mxu0 0.0
    %263 = vmatpush1.msra.mxu0 0.0
    %264 = vmatprep.subr.mxu0 0.0
    %265 = vmatpush1.msra.mxu0 0.0
    %266 = vmatprep.subr.mxu0 0.0
    %267 = vmatpush1.msra.mxu0 0.0
    %268 = vmatprep.subr.mxu0 0.0
    %269 = vmatpush1.msra.mxu0 0.0
    %270 = vmatprep.subr.mxu0 0.0
    %271 = vmatpush1.msra.mxu0 0.0
    %272 = vmatprep.subr.mxu0 0.0
    %273 = vmatpush1.msra.mxu0 0.0
    %274 = vmatprep.subr.mxu0 0.0
    %275 = vmatpush1.msra.mxu0 0.0
    %276 = vmatprep.subr.mxu0 0.0
    %277 = vmatpush1.msra.mxu0 0.0
    %278 = vmatprep.subr.mxu0 0.0
    %279 = vmatpush1.msra.mxu0 0.0
    %280 = vmatprep.subr.mxu0 0.0
    %281 = vmatpush1.msra.mxu0 0.0
    %282 = vmatprep.subr.mxu0 0.0
    %283 = vmatpush1.msra.mxu0 0.0
    %284 = vmatprep.subr.mxu0 0.0
    %285 = vmatpush1.msra.mxu0 0.0
    %286 = vmatprep.subr.mxu0 0.0
    %287 = vmatpush1.msra.mxu0 0.0
    %288 = vmatprep.subr.mxu0 0.0
    %289 = vmatpush1.msra.mxu0 0.0
    %290 = vmatprep.subr.mxu0 0.0
    %291 = vmatpush1.msra.mxu0 0.0
    %292 = vmatprep.subr.mxu0 0.0
    %293 = vmatpush1.msra.mxu0 0.0
    %294 = vmatprep.subr.mxu0 0.0
    %295 = vmatpush1.msra.mxu0 0.0
    %296 = vmatprep.subr.mxu0 0.0
    %297 = vmatpush1.msra.mxu0 0.0
    %298 = vmatprep.subr.mxu0 0.0
    %299 = vmatpush1.msra.mxu0 0.0
    %300 = vmatprep.subr.mxu0 0.0
    %301 = vmatpush1.msra.mxu0 0.0
    %302 = vmatprep.subr.mxu0 0.0
    %303 = vmatpush1.msra.mxu0 0.0
    %304 = vmatprep.subr.mxu0 0.0
    %305 = vmatpush1.msra.mxu0 0.0
    %306 = vmatprep.subr.mxu0 0.0
    %307 = vmatpush1.msra.mxu0 0.0
    %308 = vmatprep.subr.mxu0 0.0
    %309 = vmatpush1.msra.mxu0 0.0
    %310 = vmatprep.mubr.f32.mxu0 0.0
    %311 = vmatmul.mubr.f32.gmra.mrb[0].mxu0 %v244
    %v312 = vpop.f32.mrb[0].mxu0
    %v313 = vadd.f32 %v225, %v312
    %v314 = vpop.f32.mrb[0].mxu0
    %v315 = vadd.f32 %v229, %v314
    %316 = vdwg.mxu0
    %317 = vmatprep.subr.mxu0 %v208
    %318 = vmatpush1.msra.mxu0 %v207
    %319 = vmatprep.subr.mxu0 %v212
    %320 = vmatpush1.msra.mxu0 %v211
    %321 = vmatprep.subr.mxu0 %v216
    %322 = vmatpush1.msra.mxu0 %v215
    %323 = vmatprep.subr.mxu0 %v220
    %324 = vmatpush1.msra.mxu0 %v219
    %325 = vmatprep.subr.mxu0 0.0
    %326 = vmatpush1.msra.mxu0 0.0
    %327 = vmatprep.subr.mxu0 0.0
    %328 = vmatpush1.msra.mxu0 0.0
    %329 = vmatprep.subr.mxu0 0.0
    %330 = vmatpush1.msra.mxu0 0.0
    %331 = vmatprep.subr.mxu0 0.0
    %332 = vmatpush1.msra.mxu0 0.0
    %333 = vmatprep.subr.mxu0 0.0
    %334 = vmatpush1.msra.mxu0 0.0
    %335 = vmatprep.subr.mxu0 0.0
    %336 = vmatpush1.msra.mxu0 0.0
    %337 = vmatprep.subr.mxu0 0.0
    %338 = vmatpush1.msra.mxu0 0.0
    %339 = vmatprep.subr.mxu0 0.0
    %340 = vmatpush1.msra.mxu0 0.0
    %341 = vmatprep.subr.mxu0 0.0
    %342 = vmatpush1.msra.mxu0 0.0
    %343 = vmatprep.subr.mxu0 0.0
    %344 = vmatpush1.msra.mxu0 0.0
    %345 = vmatprep.subr.mxu0 0.0
    %346 = vmatpush1.msra.mxu0 0.0
    %347 = vmatprep.subr.mxu0 0.0
    %348 = vmatpush1.msra.mxu0 0.0
    %349 = vmatprep.subr.mxu0 0.0
    %350 = vmatpush1.msra.mxu0 0.0
    %351 = vmatprep.subr.mxu0 0.0
    %352 = vmatpush1.msra.mxu0 0.0
    %353 = vmatprep.subr.mxu0 0.0
    %354 = vmatpush1.msra.mxu0 0.0
    %355 = vmatprep.subr.mxu0 0.0
    %356 = vmatpush1.msra.mxu0 0.0
    %357 = vmatprep.subr.mxu0 0.0
    %358 = vmatpush1.msra.mxu0 0.0
    %359 = vmatprep.subr.mxu0 0.0
    %360 = vmatpush1.msra.mxu0 0.0
    %361 = vmatprep.subr.mxu0 0.0
    %362 = vmatpush1.msra.mxu0 0.0
    %363 = vmatprep.subr.mxu0 0.0
    %364 = vmatpush1.msra.mxu0 0.0
    %365 = vmatprep.subr.mxu0 0.0
    %366 = vmatpush1.msra.mxu0 0.0
    %367 = vmatprep.subr.mxu0 0.0
    %368 = vmatpush1.msra.mxu0 0.0
    %369 = vmatprep.subr.mxu0 0.0
    %370 = vmatpush1.msra.mxu0 0.0
    %371 = vmatprep.subr.mxu0 0.0
    %372 = vmatpush1.msra.mxu0 0.0
    %373 = vmatprep.subr.mxu0 0.0
    %374 = vmatpush1.msra.mxu0 0.0
    %375 = vmatprep.subr.mxu0 0.0
    %376 = vmatpush1.msra.mxu0 0.0
    %377 = vmatprep.subr.mxu0 0.0
    %378 = vmatpush1.msra.mxu0 0.0
    %379 = vmatprep.subr.mxu0 0.0
    %380 = vmatpush1.msra.mxu0 0.0
    %381 = vmatprep.mubr.f32.mxu0 0.0
    %382 = vmatmul.mubr.f32.gmra.mrb[0].mxu0 %v244
    %v383 = vpop.f32.mrb[0].mxu0
    %v384 = vadd.f32 %v233, %v383
    %v385 = vpop.f32.mrb[0].mxu0
    %v386 = vadd.f32 %v237, %v385
    %387 = vdwg.mxu0
    %vm388 = vcmp.ge.f32.partialorder %v313, 0.0
    %vm389 = vcmp.ge.f32.partialorder %v315, 0.0
    %vm390 = vcmp.ge.f32.partialorder %v384, 0.0
    %vm391 = vcmp.ge.f32.partialorder %v386, 0.0
    %v392 = vmul.f32 %v313, 0.01
    %v393 = vmul.f32 %v315, 0.01
    %v394 = vmul.f32 %v384, 0.01
    %v395 = vmul.f32 %v386, 0.01
    %v396 = vsel %vm388, %v313, %v392
    %v397 = vsel %vm389, %v315, %v393
    %v398 = vsel %vm390, %v384, %v394
    %v399 = vsel %vm391, %v386, %v395
    %v400 = vld [vmem:[#allocation7] sm:$0xff]
    %v401 = vld [vmem:[#allocation7 + $0x8] sm:$0xff]
    %v402 = vld [vmem:[#allocation7 + $0x10] sm:$0xff]
    %v403 = vld [vmem:[#allocation7 + $0x18] sm:$0xff]
    %v404 = vld [vmem:[#allocation7 + $0x20] sm:$0xff]
    %v405 = vld [vmem:[#allocation7 + $0x28] sm:$0xff]
    %v406 = vld [vmem:[#allocation7 + $0x30] sm:$0xff]
    %v407 = vld [vmem:[#allocation7 + $0x38] sm:$0xff]
    %v408 = vld [vmem:[#allocation7 + $0x40] sm:$0xff]
    %v409 = vld [vmem:[#allocation7 + $0x48] sm:$0xff]
    %v410 = vld [vmem:[#allocation7 + $0x50] sm:$0xff]
    %v411 = vld [vmem:[#allocation7 + $0x58] sm:$0xff]
    %v412 = vld [vmem:[#allocation7 + $0x60] sm:$0xff]
    %v413 = vld [vmem:[#allocation7 + $0x68] sm:$0xff]
    %v414 = vld [vmem:[#allocation7 + $0x70] sm:$0xff]
    %v415 = vld [vmem:[#allocation7 + $0x78] sm:$0xff]
    %v416 = vld [vmem:[#allocation7 + $0x80] sm:$0xff]
    %v417 = vld [vmem:[#allocation7 + $0x88] sm:$0xff]
    %v418 = vld [vmem:[#allocation7 + $0x90] sm:$0xff]
    %v419 = vld [vmem:[#allocation7 + $0x98] sm:$0xff]
    %v420 = vld [vmem:[#allocation7 + $0xa0] sm:$0xff]
    %v421 = vld [vmem:[#allocation7 + $0xa8] sm:$0xff]
    %v422 = vld [vmem:[#allocation7 + $0xb0] sm:$0xff]
    %v423 = vld [vmem:[#allocation7 + $0xb8] sm:$0xff]
    %v424 = vld [vmem:[#allocation7 + $0xc0] sm:$0xff]
    %v425 = vld [vmem:[#allocation7 + $0xc8] sm:$0xff]
    %v426 = vld [vmem:[#allocation7 + $0xd0] sm:$0xff]
    %v427 = vld [vmem:[#allocation7 + $0xd8] sm:$0xff]
    %v428 = vld [vmem:[#allocation7 + $0xe0] sm:$0xff]
    %v429 = vld [vmem:[#allocation7 + $0xe8] sm:$0xff]
    %v430 = vld [vmem:[#allocation7 + $0xf0] sm:$0xff]
    %v431 = vld [vmem:[#allocation7 + $0xf8] sm:$0xff]
    %v432 = vld [vmem:[#allocation7 + $0x100] sm:$0xff]
    %v433 = vld [vmem:[#allocation7 + $0x108] sm:$0xff]
    %v434 = vld [vmem:[#allocation7 + $0x110] sm:$0xff]
    %v435 = vld [vmem:[#allocation7 + $0x118] sm:$0xff]
    %v436 = vld [vmem:[#allocation7 + $0x120] sm:$0xff]
    %v437 = vld [vmem:[#allocation7 + $0x128] sm:$0xff]
    %v438 = vld [vmem:[#allocation7 + $0x130] sm:$0xff]
    %v439 = vld [vmem:[#allocation7 + $0x138] sm:$0xff]
    %v440 = vld [vmem:[#allocation7 + $0x140] sm:$0xff]
    %v441 = vld [vmem:[#allocation7 + $0x148] sm:$0xff]
    %v442 = vld [vmem:[#allocation7 + $0x150] sm:$0xff]
    %v443 = vld [vmem:[#allocation7 + $0x158] sm:$0xff]
    %v444 = vld [vmem:[#allocation7 + $0x160] sm:$0xff]
    %v445 = vld [vmem:[#allocation7 + $0x168] sm:$0xff]
    %v446 = vld [vmem:[#allocation7 + $0x170] sm:$0xff]
    %v447 = vld [vmem:[#allocation7 + $0x178] sm:$0xff]
    %v448 = vld [vmem:[#allocation7 + $0x180] sm:$0xff]
    %v449 = vld [vmem:[#allocation7 + $0x188] sm:$0xff]
    %v450 = vld [vmem:[#allocation7 + $0x190] sm:$0xff]
    %v451 = vld [vmem:[#allocation7 + $0x198] sm:$0xff]
    %v452 = vld [vmem:[#allocation7 + $0x1a0] sm:$0xff]
    %v453 = vld [vmem:[#allocation7 + $0x1a8] sm:$0xff]
    %v454 = vld [vmem:[#allocation7 + $0x1b0] sm:$0xff]
    %v455 = vld [vmem:[#allocation7 + $0x1b8] sm:$0xff]
    %v456 = vld [vmem:[#allocation7 + $0x1c0] sm:$0xff]
    %v457 = vld [vmem:[#allocation7 + $0x1c8] sm:$0xff]
    %v458 = vld [vmem:[#allocation7 + $0x1d0] sm:$0xff]
    %v459 = vld [vmem:[#allocation7 + $0x1d8] sm:$0xff]
    %v460 = vld [vmem:[#allocation7 + $0x1e0] sm:$0xff]
    %v461 = vld [vmem:[#allocation7 + $0x1e8] sm:$0xff]
    %v462 = vld [vmem:[#allocation7 + $0x1f0] sm:$0xff]
    %v463 = vld [vmem:[#allocation7 + $0x1f8] sm:$0xff]
    %v464 = vld [vmem:[#allocation7 + $0x200] sm:$0xff]
    %v465 = vld [vmem:[#allocation7 + $0x208] sm:$0xff]
    %v466 = vld [vmem:[#allocation7 + $0x210] sm:$0xff]
    %v467 = vld [vmem:[#allocation7 + $0x218] sm:$0xff]
    %v468 = vld [vmem:[#allocation7 + $0x220] sm:$0xff]
    %v469 = vld [vmem:[#allocation7 + $0x228] sm:$0xff]
    %v470 = vld [vmem:[#allocation7 + $0x230] sm:$0xff]
    %v471 = vld [vmem:[#allocation7 + $0x238] sm:$0xff]
    %v472 = vld [vmem:[#allocation7 + $0x240] sm:$0xff]
    %v473 = vld [vmem:[#allocation7 + $0x248] sm:$0xff]
    %v474 = vld [vmem:[#allocation7 + $0x250] sm:$0xff]
    %v475 = vld [vmem:[#allocation7 + $0x258] sm:$0xff]
    %v476 = vld [vmem:[#allocation7 + $0x260] sm:$0xff]
    %v477 = vld [vmem:[#allocation7 + $0x268] sm:$0xff]
    %v478 = vld [vmem:[#allocation7 + $0x270] sm:$0xff]
    %v479 = vld [vmem:[#allocation7 + $0x278] sm:$0xff]
    %v480 = vld [vmem:[#allocation7 + $0x280] sm:$0xff]
    %v481 = vld [vmem:[#allocation7 + $0x288] sm:$0xff]
    %v482 = vld [vmem:[#allocation7 + $0x290] sm:$0xff]
    %v483 = vld [vmem:[#allocation7 + $0x298] sm:$0xff]
    %v484 = vld [vmem:[#allocation7 + $0x2a0] sm:$0xff]
    %v485 = vld [vmem:[#allocation7 + $0x2a8] sm:$0xff]
    %v486 = vld [vmem:[#allocation7 + $0x2b0] sm:$0xff]
    %v487 = vld [vmem:[#allocation7 + $0x2b8] sm:$0xff]
    %v488 = vld [vmem:[#allocation7 + $0x2c0] sm:$0xff]
    %v489 = vld [vmem:[#allocation7 + $0x2c8] sm:$0xff]
    %v490 = vld [vmem:[#allocation7 + $0x2d0] sm:$0xff]
    %v491 = vld [vmem:[#allocation7 + $0x2d8] sm:$0xff]
    %v492 = vld [vmem:[#allocation7 + $0x2e0] sm:$0xff]
    %v493 = vld [vmem:[#allocation7 + $0x2e8] sm:$0xff]
    %v494 = vld [vmem:[#allocation7 + $0x2f0] sm:$0xff]
    %v495 = vld [vmem:[#allocation7 + $0x2f8] sm:$0xff]
    %v496 = vld [vmem:[#allocation7 + $0x300] sm:$0xff]
    %v497 = vld [vmem:[#allocation7 + $0x308] sm:$0xff]
    %v498 = vld [vmem:[#allocation7 + $0x310] sm:$0xff]
    %v499 = vld [vmem:[#allocation7 + $0x318] sm:$0xff]
    %v500 = vld [vmem:[#allocation7 + $0x320] sm:$0xff]
    %v501 = vld [vmem:[#allocation7 + $0x328] sm:$0xff]
    %v502 = vld [vmem:[#allocation7 + $0x330] sm:$0xff]
    %v503 = vld [vmem:[#allocation7 + $0x338] sm:$0xff]
    %v504 = vld [vmem:[#allocation7 + $0x340] sm:$0xff]
    %v505 = vld [vmem:[#allocation7 + $0x348] sm:$0xff]
    %v506 = vld [vmem:[#allocation7 + $0x350] sm:$0xff]
    %v507 = vld [vmem:[#allocation7 + $0x358] sm:$0xff]
    %v508 = vld [vmem:[#allocation7 + $0x360] sm:$0xff]
    %v509 = vld [vmem:[#allocation7 + $0x368] sm:$0xff]
    %v510 = vld [vmem:[#allocation7 + $0x370] sm:$0xff]
    %v511 = vld [vmem:[#allocation7 + $0x378] sm:$0xff]
    %v512 = vld [vmem:[#allocation7 + $0x380] sm:$0xff]
    %v513 = vld [vmem:[#allocation7 + $0x388] sm:$0xff]
    %v514 = vld [vmem:[#allocation7 + $0x390] sm:$0xff]
    %v515 = vld [vmem:[#allocation7 + $0x398] sm:$0xff]
    %v516 = vld [vmem:[#allocation7 + $0x3a0] sm:$0xff]
    %v517 = vld [vmem:[#allocation7 + $0x3a8] sm:$0xff]
    %v518 = vld [vmem:[#allocation7 + $0x3b0] sm:$0xff]
    %v519 = vld [vmem:[#allocation7 + $0x3b8] sm:$0xff]
    %v520 = vld [vmem:[#allocation7 + $0x3c0] sm:$0xff]
    %v521 = vld [vmem:[#allocation7 + $0x3c8] sm:$0xff]
    %v522 = vld [vmem:[#allocation7 + $0x3d0] sm:$0xff]
    %v523 = vld [vmem:[#allocation7 + $0x3d8] sm:$0xff]
    %v524 = vld [vmem:[#allocation7 + $0x3e0] sm:$0xff]
    %v525 = vld [vmem:[#allocation7 + $0x3e8] sm:$0xff]
    %v526 = vld [vmem:[#allocation7 + $0x3f0] sm:$0xff]
    %v527 = vld [vmem:[#allocation7 + $0x3f8] sm:$0xff]
    %v528 = vld [vmem:[#allocation7 + $0x400] sm:$0xff]
    %v529 = vld [vmem:[#allocation7 + $0x408] sm:$0xff]
    %v530 = vld [vmem:[#allocation7 + $0x410] sm:$0xff]
    %v531 = vld [vmem:[#allocation7 + $0x418] sm:$0xff]
    %v532 = vld [vmem:[#allocation7 + $0x420] sm:$0xff]
    %v533 = vld [vmem:[#allocation7 + $0x428] sm:$0xff]
    %v534 = vld [vmem:[#allocation7 + $0x430] sm:$0xff]
    %v535 = vld [vmem:[#allocation7 + $0x438] sm:$0xff]
    %v536 = vld [vmem:[#allocation7 + $0x440] sm:$0xff]
    %v537 = vld [vmem:[#allocation7 + $0x448] sm:$0xff]
    %v538 = vld [vmem:[#allocation7 + $0x450] sm:$0xff]
    %v539 = vld [vmem:[#allocation7 + $0x458] sm:$0xff]
    %v540 = vld [vmem:[#allocation7 + $0x460] sm:$0xff]
    %v541 = vld [vmem:[#allocation7 + $0x468] sm:$0xff]
    %v542 = vld [vmem:[#allocation7 + $0x470] sm:$0xff]
    %v543 = vld [vmem:[#allocation7 + $0x478] sm:$0xff]
    %v544 = vld [vmem:[#allocation7 + $0x480] sm:$0xff]
    %v545 = vld [vmem:[#allocation7 + $0x488] sm:$0xff]
    %v546 = vld [vmem:[#allocation7 + $0x490] sm:$0xff]
    %v547 = vld [vmem:[#allocation7 + $0x498] sm:$0xff]
    %v548 = vld [vmem:[#allocation7 + $0x4a0] sm:$0xff]
    %v549 = vld [vmem:[#allocation7 + $0x4a8] sm:$0xff]
    %v550 = vld [vmem:[#allocation7 + $0x4b0] sm:$0xff]
    %v551 = vld [vmem:[#allocation7 + $0x4b8] sm:$0xff]
    %v552 = vld [vmem:[#allocation7 + $0x4c0] sm:$0xff]
    %v553 = vld [vmem:[#allocation7 + $0x4c8] sm:$0xff]
    %v554 = vld [vmem:[#allocation7 + $0x4d0] sm:$0xff]
    %v555 = vld [vmem:[#allocation7 + $0x4d8] sm:$0xff]
    %v556 = vld [vmem:[#allocation7 + $0x4e0] sm:$0xff]
    %v557 = vld [vmem:[#allocation7 + $0x4e8] sm:$0xff]
    %v558 = vld [vmem:[#allocation7 + $0x4f0] sm:$0xff]
    %v559 = vld [vmem:[#allocation7 + $0x4f8] sm:$0xff]
    %v560 = vld [vmem:[#allocation7 + $0x500] sm:$0xff]
    %v561 = vld [vmem:[#allocation7 + $0x508] sm:$0xff]
    %v562 = vld [vmem:[#allocation7 + $0x510] sm:$0xff]
    %v563 = vld [vmem:[#allocation7 + $0x518] sm:$0xff]
    %v564 = vld [vmem:[#allocation7 + $0x520] sm:$0xff]
    %v565 = vld [vmem:[#allocation7 + $0x528] sm:$0xff]
    %v566 = vld [vmem:[#allocation7 + $0x530] sm:$0xff]
    %v567 = vld [vmem:[#allocation7 + $0x538] sm:$0xff]
    %v568 = vld [vmem:[#allocation7 + $0x540] sm:$0xff]
    %v569 = vld [vmem:[#allocation7 + $0x548] sm:$0xff]
    %v570 = vld [vmem:[#allocation7 + $0x550] sm:$0xff]
    %v571 = vld [vmem:[#allocation7 + $0x558] sm:$0xff]
    %v572 = vld [vmem:[#allocation7 + $0x560] sm:$0xff]
    %v573 = vld [vmem:[#allocation7 + $0x568] sm:$0xff]
    %v574 = vld [vmem:[#allocation7 + $0x570] sm:$0xff]
    %v575 = vld [vmem:[#allocation7 + $0x578] sm:$0xff]
    %v576 = vld [vmem:[#allocation7 + $0x580] sm:$0xff]
    %v577 = vld [vmem:[#allocation7 + $0x588] sm:$0xff]
    %v578 = vld [vmem:[#allocation7 + $0x590] sm:$0xff]
    %v579 = vld [vmem:[#allocation7 + $0x598] sm:$0xff]
    %v580 = vld [vmem:[#allocation7 + $0x5a0] sm:$0xff]
    %v581 = vld [vmem:[#allocation7 + $0x5a8] sm:$0xff]
    %v582 = vld [vmem:[#allocation7 + $0x5b0] sm:$0xff]
    %v583 = vld [vmem:[#allocation7 + $0x5b8] sm:$0xff]
    %v584 = vld [vmem:[#allocation7 + $0x5c0] sm:$0xff]
    %v585 = vld [vmem:[#allocation7 + $0x5c8] sm:$0xff]
    %v586 = vld [vmem:[#allocation7 + $0x5d0] sm:$0xff]
    %v587 = vld [vmem:[#allocation7 + $0x5d8] sm:$0xff]
    %v588 = vld [vmem:[#allocation7 + $0x5e0] sm:$0xff]
    %v589 = vld [vmem:[#allocation7 + $0x5e8] sm:$0xff]
    %v590 = vld [vmem:[#allocation7 + $0x5f0] sm:$0xff]
    %v591 = vld [vmem:[#allocation7 + $0x5f8] sm:$0xff]
    %v592 = vld [vmem:[#allocation7 + $0x600] sm:$0xff]
    %v593 = vld [vmem:[#allocation7 + $0x608] sm:$0xff]
    %v594 = vld [vmem:[#allocation7 + $0x610] sm:$0xff]
    %v595 = vld [vmem:[#allocation7 + $0x618] sm:$0xff]
    %v596 = vld [vmem:[#allocation7 + $0x620] sm:$0xff]
    %v597 = vld [vmem:[#allocation7 + $0x628] sm:$0xff]
    %v598 = vld [vmem:[#allocation7 + $0x630] sm:$0xff]
    %v599 = vld [vmem:[#allocation7 + $0x638] sm:$0xff]
    %v600 = vld [vmem:[#allocation7 + $0x640] sm:$0xff]
    %v601 = vld [vmem:[#allocation7 + $0x648] sm:$0xff]
    %v602 = vld [vmem:[#allocation7 + $0x650] sm:$0xff]
    %v603 = vld [vmem:[#allocation7 + $0x658] sm:$0xff]
    %v604 = vld [vmem:[#allocation7 + $0x660] sm:$0xff]
    %v605 = vld [vmem:[#allocation7 + $0x668] sm:$0xff]
    %v606 = vld [vmem:[#allocation7 + $0x670] sm:$0xff]
    %v607 = vld [vmem:[#allocation7 + $0x678] sm:$0xff]
    %v608 = vld [vmem:[#allocation7 + $0x680] sm:$0xff]
    %v609 = vld [vmem:[#allocation7 + $0x688] sm:$0xff]
    %v610 = vld [vmem:[#allocation7 + $0x690] sm:$0xff]
    %v611 = vld [vmem:[#allocation7 + $0x698] sm:$0xff]
    %v612 = vld [vmem:[#allocation7 + $0x6a0] sm:$0xff]
    %v613 = vld [vmem:[#allocation7 + $0x6a8] sm:$0xff]
    %v614 = vld [vmem:[#allocation7 + $0x6b0] sm:$0xff]
    %v615 = vld [vmem:[#allocation7 + $0x6b8] sm:$0xff]
    %v616 = vld [vmem:[#allocation7 + $0x6c0] sm:$0xff]
    %v617 = vld [vmem:[#allocation7 + $0x6c8] sm:$0xff]
    %v618 = vld [vmem:[#allocation7 + $0x6d0] sm:$0xff]
    %v619 = vld [vmem:[#allocation7 + $0x6d8] sm:$0xff]
    %v620 = vld [vmem:[#allocation7 + $0x6e0] sm:$0xff]
    %v621 = vld [vmem:[#allocation7 + $0x6e8] sm:$0xff]
    %v622 = vld [vmem:[#allocation7 + $0x6f0] sm:$0xff]
    %v623 = vld [vmem:[#allocation7 + $0x6f8] sm:$0xff]
    %v624 = vld [vmem:[#allocation7 + $0x700] sm:$0xff]
    %v625 = vld [vmem:[#allocation7 + $0x708] sm:$0xff]
    %v626 = vld [vmem:[#allocation7 + $0x710] sm:$0xff]
    %v627 = vld [vmem:[#allocation7 + $0x718] sm:$0xff]
    %v628 = vld [vmem:[#allocation7 + $0x720] sm:$0xff]
    %v629 = vld [vmem:[#allocation7 + $0x728] sm:$0xff]
    %v630 = vld [vmem:[#allocation7 + $0x730] sm:$0xff]
    %v631 = vld [vmem:[#allocation7 + $0x738] sm:$0xff]
    %v632 = vld [vmem:[#allocation7 + $0x740] sm:$0xff]
    %v633 = vld [vmem:[#allocation7 + $0x748] sm:$0xff]
    %v634 = vld [vmem:[#allocation7 + $0x750] sm:$0xff]
    %v635 = vld [vmem:[#allocation7 + $0x758] sm:$0xff]
    %v636 = vld [vmem:[#allocation7 + $0x760] sm:$0xff]
    %v637 = vld [vmem:[#allocation7 + $0x768] sm:$0xff]
    %v638 = vld [vmem:[#allocation7 + $0x770] sm:$0xff]
    %v639 = vld [vmem:[#allocation7 + $0x778] sm:$0xff]
    %v641 = vlaneseq
    %v642 = vshrl.u32 %v641, 7
    %v643 = vsub.s32 0, %v642
    %v644 = vrot.slane %v119, %v643
    %v645 = vlaneseq
    %v646 = vshrl.u32 %v645, 7
    %v647 = vsub.s32 1, %v646
    %v648 = vrot.slane %v119, %v647
    %v649 = vlaneseq
    %v650 = vshrl.u32 %v649, 7
    %v651 = vsub.s32 2, %v650
    %v652 = vrot.slane %v119, %v651
    %v653 = vlaneseq
    %v654 = vshrl.u32 %v653, 7
    %v655 = vsub.s32 3, %v654
    %v656 = vrot.slane %v119, %v655
    %vm661 = vcmask 785408
    %v663 = vsel %vm661, %v399, 0
    %665 = vmatprep.subr.mxu0 %v401
    %666 = vmatpush1.msra.mxu0 %v400
    %667 = vmatprep.subr.mxu0 %v405
    %668 = vmatpush1.msra.mxu0 %v404
    %669 = vmatprep.subr.mxu0 %v409
    %670 = vmatpush1.msra.mxu0 %v408
    %671 = vmatprep.subr.mxu0 %v413
    %672 = vmatpush1.msra.mxu0 %v412
    %673 = vmatprep.subr.mxu0 %v417
    %674 = vmatpush1.msra.mxu0 %v416
    %675 = vmatprep.subr.mxu0 %v421
    %676 = vmatpush1.msra.mxu0 %v420
    %677 = vmatprep.subr.mxu0 %v425
    %678 = vmatpush1.msra.mxu0 %v424
    %679 = vmatprep.subr.mxu0 %v429
    %680 = vmatpush1.msra.mxu0 %v428
    %681 = vmatprep.subr.mxu0 %v433
    %682 = vmatpush1.msra.mxu0 %v432
    %683 = vmatprep.subr.mxu0 %v437
    %684 = vmatpush1.msra.mxu0 %v436
    %685 = vmatprep.subr.mxu0 %v441
    %686 = vmatpush1.msra.mxu0 %v440
    %687 = vmatprep.subr.mxu0 %v445
    %688 = vmatpush1.msra.mxu0 %v444
    %689 = vmatprep.subr.mxu0 %v449
    %690 = vmatpush1.msra.mxu0 %v448
    %691 = vmatprep.subr.mxu0 %v453
    %692 = vmatpush1.msra.mxu0 %v452
    %693 = vmatprep.subr.mxu0 %v457
    %694 = vmatpush1.msra.mxu0 %v456
    %695 = vmatprep.subr.mxu0 %v461
    %696 = vmatpush1.msra.mxu0 %v460
    %697 = vmatprep.subr.mxu0 %v465
    %698 = vmatpush1.msra.mxu0 %v464
    %699 = vmatprep.subr.mxu0 %v469
    %700 = vmatpush1.msra.mxu0 %v468
    %701 = vmatprep.subr.mxu0 %v473
    %702 = vmatpush1.msra.mxu0 %v472
    %703 = vmatprep.subr.mxu0 %v477
    %704 = vmatpush1.msra.mxu0 %v476
    %705 = vmatprep.subr.mxu0 %v481
    %706 = vmatpush1.msra.mxu0 %v480
    %707 = vmatprep.subr.mxu0 %v485
    %708 = vmatpush1.msra.mxu0 %v484
    %709 = vmatprep.subr.mxu0 %v489
    %710 = vmatpush1.msra.mxu0 %v488
    %711 = vmatprep.subr.mxu0 %v493
    %712 = vmatpush1.msra.mxu0 %v492
    %713 = vmatprep.subr.mxu0 %v497
    %714 = vmatpush1.msra.mxu0 %v496
    %715 = vmatprep.subr.mxu0 %v501
    %716 = vmatpush1.msra.mxu0 %v500
    %717 = vmatprep.subr.mxu0 %v505
    %718 = vmatpush1.msra.mxu0 %v504
    %719 = vmatprep.subr.mxu0 %v509
    %720 = vmatpush1.msra.mxu0 %v508
    %721 = vmatprep.subr.mxu0 %v513
    %722 = vmatpush1.msra.mxu0 %v512
    %723 = vmatprep.subr.mxu0 %v517
    %724 = vmatpush1.msra.mxu0 %v516
    %725 = vmatprep.subr.mxu0 %v521
    %726 = vmatpush1.msra.mxu0 %v520
    %727 = vmatprep.subr.mxu0 %v525
    %728 = vmatpush1.msra.mxu0 %v524
    %729 = vmatprep.mubr.f32.mxu0 %v397
    %730 = vmatmul.mubr.f32.gmra.mrb[0].mxu0 %v396
    %v731 = vpop.f32.mrb[0].mxu0
    %v732 = vadd.f32 %v644, %v731
    %v733 = vpop.f32.mrb[0].mxu0
    %v734 = vadd.f32 %v648, %v733
    %735 = vdwg.mxu0
    %736 = vmatprep.subr.mxu0 %v529
    %737 = vmatpush1.msra.mxu0 %v528
    %738 = vmatprep.subr.mxu0 %v533
    %739 = vmatpush1.msra.mxu0 %v532
    %740 = vmatprep.subr.mxu0 %v537
    %741 = vmatpush1.msra.mxu0 %v536
    %742 = vmatprep.subr.mxu0 %v541
    %743 = vmatpush1.msra.mxu0 %v540
    %744 = vmatprep.subr.mxu0 %v545
    %745 = vmatpush1.msra.mxu0 %v544
    %746 = vmatprep.subr.mxu0 %v549
    %747 = vmatpush1.msra.mxu0 %v548
    %748 = vmatprep.subr.mxu0 %v553
    %749 = vmatpush1.msra.mxu0 %v552
    %750 = vmatprep.subr.mxu0 %v557
    %751 = vmatpush1.msra.mxu0 %v556
    %752 = vmatprep.subr.mxu0 %v561
    %753 = vmatpush1.msra.mxu0 %v560
    %754 = vmatprep.subr.mxu0 %v565
    %755 = vmatpush1.msra.mxu0 %v564
    %756 = vmatprep.subr.mxu0 %v569
    %757 = vmatpush1.msra.mxu0 %v568
    %758 = vmatprep.subr.mxu0 %v573
    %759 = vmatpush1.msra.mxu0 %v572
    %760 = vmatprep.subr.mxu0 %v577
    %761 = vmatpush1.msra.mxu0 %v576
    %762 = vmatprep.subr.mxu0 %v581
    %763 = vmatpush1.msra.mxu0 %v580
    %764 = vmatprep.subr.mxu0 %v585
    %765 = vmatpush1.msra.mxu0 %v584
    %766 = vmatprep.subr.mxu0 %v589
    %767 = vmatpush1.msra.mxu0 %v588
    %768 = vmatprep.subr.mxu0 %v593
    %769 = vmatpush1.msra.mxu0 %v592
    %770 = vmatprep.subr.mxu0 %v597
    %771 = vmatpush1.msra.mxu0 %v596
    %772 = vmatprep.subr.mxu0 %v601
    %773 = vmatpush1.msra.mxu0 %v600
    %774 = vmatprep.subr.mxu0 %v605
    %775 = vmatpush1.msra.mxu0 %v604
    %776 = vmatprep.subr.mxu0 %v609
    %777 = vmatpush1.msra.mxu0 %v608
    %778 = vmatprep.subr.mxu0 %v613
    %779 = vmatpush1.msra.mxu0 %v612
    %780 = vmatprep.subr.mxu0 %v617
    %781 = vmatpush1.msra.mxu0 %v616
    %782 = vmatprep.subr.mxu0 %v621
    %783 = vmatpush1.msra.mxu0 %v620
    %784 = vmatprep.subr.mxu0 %v625
    %785 = vmatpush1.msra.mxu0 %v624
    %786 = vmatprep.subr.mxu0 %v629
    %787 = vmatpush1.msra.mxu0 %v628
    %788 = vmatprep.subr.mxu0 %v633
    %789 = vmatpush1.msra.mxu0 %v632
    %790 = vmatprep.subr.mxu0 %v637
    %791 = vmatpush1.msra.mxu0 %v636
    %792 = vmatprep.subr.mxu0 0.0
    %793 = vmatpush1.msra.mxu0 0.0
    %794 = vmatprep.subr.mxu0 0.0
    %795 = vmatpush1.msra.mxu0 0.0
    %796 = vmatprep.subr.mxu0 0.0
    %797 = vmatpush1.msra.mxu0 0.0
    %798 = vmatprep.subr.mxu0 0.0
    %799 = vmatpush1.msra.mxu0 0.0
    %800 = vmatprep.mubr.f32.mxu0 %v663
    %801 = vmatmul.mubr.f32.gmra.mrb[0].mxu0 %v398
    %v802 = vpop.f32.mrb[0].mxu0
    %v803 = vadd.f32 %v732, %v802
    %v804 = vpop.f32.mrb[0].mxu0
    %v805 = vadd.f32 %v734, %v804
    %806 = vdwg.mxu0
    %807 = vmatprep.subr.mxu0 %v403
    %808 = vmatpush1.msra.mxu0 %v402
    %809 = vmatprep.subr.mxu0 %v407
    %810 = vmatpush1.msra.mxu0 %v406
    %811 = vmatprep.subr.mxu0 %v411
    %812 = vmatpush1.msra.mxu0 %v410
    %813 = vmatprep.subr.mxu0 %v415
    %814 = vmatpush1.msra.mxu0 %v414
    %815 = vmatprep.subr.mxu0 %v419
    %816 = vmatpush1.msra.mxu0 %v418
    %817 = vmatprep.subr.mxu0 %v423
    %818 = vmatpush1.msra.mxu0 %v422
    %819 = vmatprep.subr.mxu0 %v427
    %820 = vmatpush1.msra.mxu0 %v426
    %821 = vmatprep.subr.mxu0 %v431
    %822 = vmatpush1.msra.mxu0 %v430
    %823 = vmatprep.subr.mxu0 %v435
    %824 = vmatpush1.msra.mxu0 %v434
    %825 = vmatprep.subr.mxu0 %v439
    %826 = vmatpush1.msra.mxu0 %v438
    %827 = vmatprep.subr.mxu0 %v443
    %828 = vmatpush1.msra.mxu0 %v442
    %829 = vmatprep.subr.mxu0 %v447
    %830 = vmatpush1.msra.mxu0 %v446
    %831 = vmatprep.subr.mxu0 %v451
    %832 = vmatpush1.msra.mxu0 %v450
    %833 = vmatprep.subr.mxu0 %v455
    %834 = vmatpush1.msra.mxu0 %v454
    %835 = vmatprep.subr.mxu0 %v459
    %836 = vmatpush1.msra.mxu0 %v458
    %837 = vmatprep.subr.mxu0 %v463
    %838 = vmatpush1.msra.mxu0 %v462
    %839 = vmatprep.subr.mxu0 %v467
    %840 = vmatpush1.msra.mxu0 %v466
    %841 = vmatprep.subr.mxu0 %v471
    %842 = vmatpush1.msra.mxu0 %v470
    %843 = vmatprep.subr.mxu0 %v475
    %844 = vmatpush1.msra.mxu0 %v474
    %845 = vmatprep.subr.mxu0 %v479
    %846 = vmatpush1.msra.mxu0 %v478
    %847 = vmatprep.subr.mxu0 %v483
    %848 = vmatpush1.msra.mxu0 %v482
    %849 = vmatprep.subr.mxu0 %v487
    %850 = vmatpush1.msra.mxu0 %v486
    %851 = vmatprep.subr.mxu0 %v491
    %852 = vmatpush1.msra.mxu0 %v490
    %853 = vmatprep.subr.mxu0 %v495
    %854 = vmatpush1.msra.mxu0 %v494
    %855 = vmatprep.subr.mxu0 %v499
    %856 = vmatpush1.msra.mxu0 %v498
    %857 = vmatprep.subr.mxu0 %v503
    %858 = vmatpush1.msra.mxu0 %v502
    %859 = vmatprep.subr.mxu0 %v507
    %860 = vmatpush1.msra.mxu0 %v506
    %861 = vmatprep.subr.mxu0 %v511
    %862 = vmatpush1.msra.mxu0 %v510
    %863 = vmatprep.subr.mxu0 %v515
    %864 = vmatpush1.msra.mxu0 %v514
    %865 = vmatprep.subr.mxu0 %v519
    %866 = vmatpush1.msra.mxu0 %v518
    %867 = vmatprep.subr.mxu0 %v523
    %868 = vmatpush1.msra.mxu0 %v522
    %869 = vmatprep.subr.mxu0 %v527
    %870 = vmatpush1.msra.mxu0 %v526
    %871 = vmatprep.mubr.f32.mxu0 %v397
    %872 = vmatmul.mubr.f32.gmra.mrb[0].mxu0 %v396
    %v873 = vpop.f32.mrb[0].mxu0
    %v874 = vadd.f32 %v652, %v873
    %v875 = vpop.f32.mrb[0].mxu0
    %v876 = vadd.f32 %v656, %v875
    %877 = vdwg.mxu0
    %878 = vmatprep.subr.mxu0 %v531
    %879 = vmatpush1.msra.mxu0 %v530
    %880 = vmatprep.subr.mxu0 %v535
    %881 = vmatpush1.msra.mxu0 %v534
    %882 = vmatprep.subr.mxu0 %v539
    %883 = vmatpush1.msra.mxu0 %v538
    %884 = vmatprep.subr.mxu0 %v543
    %885 = vmatpush1.msra.mxu0 %v542
    %886 = vmatprep.subr.mxu0 %v547
    %887 = vmatpush1.msra.mxu0 %v546
    %888 = vmatprep.subr.mxu0 %v551
    %889 = vmatpush1.msra.mxu0 %v550
    %890 = vmatprep.subr.mxu0 %v555
    %891 = vmatpush1.msra.mxu0 %v554
    %892 = vmatprep.subr.mxu0 %v559
    %893 = vmatpush1.msra.mxu0 %v558
    %894 = vmatprep.subr.mxu0 %v563
    %895 = vmatpush1.msra.mxu0 %v562
    %896 = vmatprep.subr.mxu0 %v567
    %897 = vmatpush1.msra.mxu0 %v566
    %898 = vmatprep.subr.mxu0 %v571
    %899 = vmatpush1.msra.mxu0 %v570
    %900 = vmatprep.subr.mxu0 %v575
    %901 = vmatpush1.msra.mxu0 %v574
    %902 = vmatprep.subr.mxu0 %v579
    %903 = vmatpush1.msra.mxu0 %v578
    %904 = vmatprep.subr.mxu0 %v583
    %905 = vmatpush1.msra.mxu0 %v582
    %906 = vmatprep.subr.mxu0 %v587
    %907 = vmatpush1.msra.mxu0 %v586
    %908 = vmatprep.subr.mxu0 %v591
    %909 = vmatpush1.msra.mxu0 %v590
    %910 = vmatprep.subr.mxu0 %v595
    %911 = vmatpush1.msra.mxu0 %v594
    %912 = vmatprep.subr.mxu0 %v599
    %913 = vmatpush1.msra.mxu0 %v598
    %914 = vmatprep.subr.mxu0 %v603
    %915 = vmatpush1.msra.mxu0 %v602
    %916 = vmatprep.subr.mxu0 %v607
    %917 = vmatpush1.msra.mxu0 %v606
    %918 = vmatprep.subr.mxu0 %v611
    %919 = vmatpush1.msra.mxu0 %v610
    %920 = vmatprep.subr.mxu0 %v615
    %921 = vmatpush1.msra.mxu0 %v614
    %922 = vmatprep.subr.mxu0 %v619
    %923 = vmatpush1.msra.mxu0 %v618
    %924 = vmatprep.subr.mxu0 %v623
    %925 = vmatpush1.msra.mxu0 %v622
    %926 = vmatprep.subr.mxu0 %v627
    %927 = vmatpush1.msra.mxu0 %v626
    %928 = vmatprep.subr.mxu0 %v631
    %929 = vmatpush1.msra.mxu0 %v630
    %930 = vmatprep.subr.mxu0 %v635
    %931 = vmatpush1.msra.mxu0 %v634
    %932 = vmatprep.subr.mxu0 %v639
    %933 = vmatpush1.msra.mxu0 %v638
    %934 = vmatprep.subr.mxu0 0.0
    %935 = vmatpush1.msra.mxu0 0.0
    %936 = vmatprep.subr.mxu0 0.0
    %937 = vmatpush1.msra.mxu0 0.0
    %938 = vmatprep.subr.mxu0 0.0
    %939 = vmatpush1.msra.mxu0 0.0
    %940 = vmatprep.subr.mxu0 0.0
    %941 = vmatpush1.msra.mxu0 0.0
    %942 = vmatprep.mubr.f32.mxu0 %v663
    %943 = vmatmul.mubr.f32.gmra.mrb[0].mxu0 %v398
    %v944 = vpop.f32.mrb[0].mxu0
    %v945 = vadd.f32 %v874, %v944
    %v946 = vpop.f32.mrb[0].mxu0
    %v947 = vadd.f32 %v876, %v946
    %948 = vdwg.mxu0
    %v949 = vmax.f32 %v803, %v945
    %v950 = vmax.f32 %v805, %v947
    %vm951 = vcmp.ge.f32.partialorder %v949, 0.0
    %vm952 = vcmp.ge.f32.partialorder %v950, 0.0
    %v953 = vmul.f32 %v949, 0.01
    %v954 = vmul.f32 %v950, 0.01
    %v955 = vsel %vm951, %v949, %v953
    %v956 = vsel %vm952, %v950, %v954
    %v957 = vld [vmem:[#allocation8] sm:$0xff]
    %v958 = vld [vmem:[#allocation8 + $0x8] sm:$0xff]
    %v959 = vld [vmem:[#allocation8 + $0x10] sm:$0xff]
    %v960 = vld [vmem:[#allocation8 + $0x18] sm:$0xff]
    %v961 = vld [vmem:[#allocation8 + $0x20] sm:$0xff]
    %v962 = vld [vmem:[#allocation8 + $0x28] sm:$0xff]
    %v963 = vld [vmem:[#allocation8 + $0x30] sm:$0xff]
    %v964 = vld [vmem:[#allocation8 + $0x38] sm:$0xff]
    %v965 = vld [vmem:[#allocation8 + $0x40] sm:$0xff]
    %v966 = vld [vmem:[#allocation8 + $0x48] sm:$0xff]
    %v967 = vld [vmem:[#allocation8 + $0x50] sm:$0xff]
    %v968 = vld [vmem:[#allocation8 + $0x58] sm:$0xff]
    %v969 = vld [vmem:[#allocation8 + $0x60] sm:$0xff]
    %v970 = vld [vmem:[#allocation8 + $0x68] sm:$0xff]
    %v971 = vld [vmem:[#allocation8 + $0x70] sm:$0xff]
    %v972 = vld [vmem:[#allocation8 + $0x78] sm:$0xff]
    %v973 = vld [vmem:[#allocation8 + $0x80] sm:$0xff]
    %v974 = vld [vmem:[#allocation8 + $0x88] sm:$0xff]
    %v975 = vld [vmem:[#allocation8 + $0x90] sm:$0xff]
    %v976 = vld [vmem:[#allocation8 + $0x98] sm:$0xff]
    %v977 = vld [vmem:[#allocation8 + $0xa0] sm:$0xff]
    %v978 = vld [vmem:[#allocation8 + $0xa8] sm:$0xff]
    %v979 = vld [vmem:[#allocation8 + $0xb0] sm:$0xff]
    %v980 = vld [vmem:[#allocation8 + $0xb8] sm:$0xff]
    %v981 = vld [vmem:[#allocation8 + $0xc0] sm:$0xff]
    %v982 = vld [vmem:[#allocation8 + $0xc8] sm:$0xff]
    %v983 = vld [vmem:[#allocation8 + $0xd0] sm:$0xff]
    %v984 = vld [vmem:[#allocation8 + $0xd8] sm:$0xff]
    %v985 = vld [vmem:[#allocation8 + $0xe0] sm:$0xff]
    %v986 = vld [vmem:[#allocation8 + $0xe8] sm:$0xff]
    %v987 = vld [vmem:[#allocation8 + $0xf0] sm:$0xff]
    %v988 = vld [vmem:[#allocation8 + $0xf8] sm:$0xff]
    %v990 = vlaneseq
    %v991 = vshrl.u32 %v990, 7
    %v992 = vsub.s32 0, %v991
    %v993 = vrot.slane %v116, %v992
    %995 = vmatprep.subr.mxu0 0.0
    %996 = vmatpush1.msra.mxu0 %v957
    %997 = vmatprep.subr.mxu0 0.0
    %998 = vmatpush1.msra.mxu0 %v958
    %999 = vmatprep.subr.mxu0 0.0
    %1000 = vmatpush1.msra.mxu0 %v959
    %1001 = vmatprep.subr.mxu0 0.0
    %1002 = vmatpush1.msra.mxu0 %v960
    %1003 = vmatprep.subr.mxu0 0.0
    %1004 = vmatpush1.msra.mxu0 %v961
    %1005 = vmatprep.subr.mxu0 0.0
    %1006 = vmatpush1.msra.mxu0 %v962
    %1007 = vmatprep.subr.mxu0 0.0
    %1008 = vmatpush1.msra.mxu0 %v963
    %1009 = vmatprep.subr.mxu0 0.0
    %1010 = vmatpush1.msra.mxu0 %v964
    %1011 = vmatprep.subr.mxu0 0.0
    %1012 = vmatpush1.msra.mxu0 %v965
    %1013 = vmatprep.subr.mxu0 0.0
    %1014 = vmatpush1.msra.mxu0 %v966
    %1015 = vmatprep.subr.mxu0 0.0
    %1016 = vmatpush1.msra.mxu0 %v967
    %1017 = vmatprep.subr.mxu0 0.0
    %1018 = vmatpush1.msra.mxu0 %v968
    %1019 = vmatprep.subr.mxu0 0.0
    %1020 = vmatpush1.msra.mxu0 %v969
    %1021 = vmatprep.subr.mxu0 0.0
    %1022 = vmatpush1.msra.mxu0 %v970
    %1023 = vmatprep.subr.mxu0 0.0
    %1024 = vmatpush1.msra.mxu0 %v971
    %1025 = vmatprep.subr.mxu0 0.0
    %1026 = vmatpush1.msra.mxu0 %v972
    %1027 = vmatprep.subr.mxu0 0.0
    %1028 = vmatpush1.msra.mxu0 %v973
    %1029 = vmatprep.subr.mxu0 0.0
    %1030 = vmatpush1.msra.mxu0 %v974
    %1031 = vmatprep.subr.mxu0 0.0
    %1032 = vmatpush1.msra.mxu0 %v975
    %1033 = vmatprep.subr.mxu0 0.0
    %1034 = vmatpush1.msra.mxu0 %v976
    %1035 = vmatprep.subr.mxu0 0.0
    %1036 = vmatpush1.msra.mxu0 %v977
    %1037 = vmatprep.subr.mxu0 0.0
    %1038 = vmatpush1.msra.mxu0 %v978
    %1039 = vmatprep.subr.mxu0 0.0
    %1040 = vmatpush1.msra.mxu0 %v979
    %1041 = vmatprep.subr.mxu0 0.0
    %1042 = vmatpush1.msra.mxu0 %v980
    %1043 = vmatprep.subr.mxu0 0.0
    %1044 = vmatpush1.msra.mxu0 %v981
    %1045 = vmatprep.subr.mxu0 0.0
    %1046 = vmatpush1.msra.mxu0 %v982
    %1047 = vmatprep.subr.mxu0 0.0
    %1048 = vmatpush1.msra.mxu0 %v983
    %1049 = vmatprep.subr.mxu0 0.0
    %1050 = vmatpush1.msra.mxu0 %v984
    %1051 = vmatprep.subr.mxu0 0.0
    %1052 = vmatpush1.msra.mxu0 %v985
    %1053 = vmatprep.subr.mxu0 0.0
    %1054 = vmatpush1.msra.mxu0 %v986
    %1055 = vmatprep.subr.mxu0 0.0
    %1056 = vmatpush1.msra.mxu0 %v987
    %1057 = vmatprep.subr.mxu0 0.0
    %1058 = vmatpush1.msra.mxu0 %v988
    %1059 = vmatprep.mubr.f32.mxu0 %v956
    %1060 = vmatmul.mubr.f32.gmra.mrb[0].mxu0 %v955
    %v1061 = vpop.f32.mrb[0].mxu0
    %v1062 = vadd.f32 %v993, %v1061
    %v1063 = vpop.f32.mrb[0].mxu0
    %1064 = vdwg.mxu0
    %v1065 = vld [vmem:[#allocation10] sm:$0xff]
    %v1066 = vld [vmem:[#allocation10 + $0x8] sm:$0xff]
    %v1067 = vld [vmem:[#allocation10 + $0x10] sm:$0xff]
    %v1068 = vld [vmem:[#allocation10 + $0x18] sm:$0xff]
    %v1069 = vld [vmem:[%s8] sm:$0x1]
    %v1070 = vld [vmem:[%s8 + $0x1] sm:$0x1]
    %v1072 = vsel %vm242, %v1069, 0
    %1074 = vmatprep.subr.mxu0 0.0
    %1075 = vmatpush1.msra.mxu0 %v1065
    %1076 = vmatprep.subr.mxu0 0.0
    %1077 = vmatpush1.msra.mxu0 %v1066
    %1078 = vmatprep.subr.mxu0 0.0
    %1079 = vmatpush1.msra.mxu0 %v1067
    %1080 = vmatprep.subr.mxu0 0.0
    %1081 = vmatpush1.msra.mxu0 %v1068
    %1082 = vmatprep.subr.mxu0 0.0
    %1083 = vmatpush1.msra.mxu0 0.0
    %1084 = vmatprep.subr.mxu0 0.0
    %1085 = vmatpush1.msra.mxu0 0.0
    %1086 = vmatprep.subr.mxu0 0.0
    %1087 = vmatpush1.msra.mxu0 0.0
    %1088 = vmatprep.subr.mxu0 0.0
    %1089 = vmatpush1.msra.mxu0 0.0
    %1090 = vmatprep.subr.mxu0 0.0
    %1091 = vmatpush1.msra.mxu0 0.0
    %1092 = vmatprep.subr.mxu0 0.0
    %1093 = vmatpush1.msra.mxu0 0.0
    %1094 = vmatprep.subr.mxu0 0.0
    %1095 = vmatpush1.msra.mxu0 0.0
    %1096 = vmatprep.subr.mxu0 0.0
    %1097 = vmatpush1.msra.mxu0 0.0
    %1098 = vmatprep.subr.mxu0 0.0
    %1099 = vmatpush1.msra.mxu0 0.0
    %1100 = vmatprep.subr.mxu0 0.0
    %1101 = vmatpush1.msra.mxu0 0.0
    %1102 = vmatprep.subr.mxu0 0.0
    %1103 = vmatpush1.msra.mxu0 0.0
    %1104 = vmatprep.subr.mxu0 0.0
    %1105 = vmatpush1.msra.mxu0 0.0
    %1106 = vmatprep.subr.mxu0 0.0
    %1107 = vmatpush1.msra.mxu0 0.0
    %1108 = vmatprep.subr.mxu0 0.0
    %1109 = vmatpush1.msra.mxu0 0.0
    %1110 = vmatprep.subr.mxu0 0.0
    %1111 = vmatpush1.msra.mxu0 0.0
    %1112 = vmatprep.subr.mxu0 0.0
    %1113 = vmatpush1.msra.mxu0 0.0
    %1114 = vmatprep.subr.mxu0 0.0
    %1115 = vmatpush1.msra.mxu0 0.0
    %1116 = vmatprep.subr.mxu0 0.0
    %1117 = vmatpush1.msra.mxu0 0.0
    %1118 = vmatprep.subr.mxu0 0.0
    %1119 = vmatpush1.msra.mxu0 0.0
    %1120 = vmatprep.subr.mxu0 0.0
    %1121 = vmatpush1.msra.mxu0 0.0
    %1122 = vmatprep.subr.mxu0 0.0
    %1123 = vmatpush1.msra.mxu0 0.0
    %1124 = vmatprep.subr.mxu0 0.0
    %1125 = vmatpush1.msra.mxu0 0.0
    %1126 = vmatprep.subr.mxu0 0.0
    %1127 = vmatpush1.msra.mxu0 0.0
    %1128 = vmatprep.subr.mxu0 0.0
    %1129 = vmatpush1.msra.mxu0 0.0
    %1130 = vmatprep.subr.mxu0 0.0
    %1131 = vmatpush1.msra.mxu0 0.0
    %1132 = vmatprep.subr.mxu0 0.0
    %1133 = vmatpush1.msra.mxu0 0.0
    %1134 = vmatprep.subr.mxu0 0.0
    %1135 = vmatpush1.msra.mxu0 0.0
    %1136 = vmatprep.subr.mxu0 0.0
    %1137 = vmatpush1.msra.mxu0 0.0
    %1138 = vmatprep.mubr.f32.mxu0 0.0
    %1139 = vmatmul.mubr.f32.gmra.mrb[0].mxu0 %v1072
    %v1140 = vpop.f32.mrb[0].mxu0
    %v1141 = vadd.f32 0.0, %v1140
    %v1142 = vpop.f32.mrb[0].mxu0
    %1143 = vdwg.mxu0
    %v1144 = vadd.f32 %v1062, %v1141
    %v1145 = vxor.u32 %v1144, 2147483648
    %v1146 = vmul.f32 %v1145, 1.442695
    %v1147 = vpow.pop %v1146
    %v1148 = vadd.f32 %v1147, 1.0
    %v1149 = vrcp.pop %v1148
    %v1150 = vmul.f32 1.0, %v1149
    %v1151 = vtanh.pop %v1144
    %1153 = vrot.lane.b32.xlu0 %v1070, 32
    %v1154 = vpop.permute.xlu0 %1153
    %v1156 = vmul.f32 %v1150, %v1154
    %1158 = vrot.lane.b32.xlu0 %v1151, 64
    %v1159 = vpop.permute.xlu0 %1158
    %v1161 = vmul.f32 %v1150, %v1159
    %1163 = vrot.lane.b32.xlu0 %v1161, 32
    %v1164 = vpop.permute.xlu0 %1163
    %v1166 = vadd.f32 %v1156, %v1164
    %v1167 = vtanh.pop %v1166
    %1169 = vrot.lane.b32.xlu0 %v1167, 64
    %v1170 = vpop.permute.xlu0 %1169
    %v1172 = vmul.f32 %v1150, %v1170
    %1174 = vrot.lane.b32.xlu0 %v1172, 32
    %v1175 = vpop.permute.xlu0 %1174
    %v1176 = vsel %vm242, %v1175, 0
    %1178 = vmatprep.subr.mxu0 0.0
    %1179 = vmatpush1.msra.mxu0 %v1065
    %1180 = vmatprep.subr.mxu0 0.0
    %1181 = vmatpush1.msra.mxu0 %v1066
    %1182 = vmatprep.subr.mxu0 0.0
    %1183 = vmatpush1.msra.mxu0 %v1067
    %1184 = vmatprep.subr.mxu0 0.0
    %1185 = vmatpush1.msra.mxu0 %v1068
    %1186 = vmatprep.subr.mxu0 0.0
    %1187 = vmatpush1.msra.mxu0 0.0
    %1188 = vmatprep.subr.mxu0 0.0
    %1189 = vmatpush1.msra.mxu0 0.0
    %1190 = vmatprep.subr.mxu0 0.0
    %1191 = vmatpush1.msra.mxu0 0.0
    %1192 = vmatprep.subr.mxu0 0.0
    %1193 = vmatpush1.msra.mxu0 0.0
    %1194 = vmatprep.subr.mxu0 0.0
    %1195 = vmatpush1.msra.mxu0 0.0
    %1196 = vmatprep.subr.mxu0 0.0
    %1197 = vmatpush1.msra.mxu0 0.0
    %1198 = vmatprep.subr.mxu0 0.0
    %1199 = vmatpush1.msra.mxu0 0.0
    %1200 = vmatprep.subr.mxu0 0.0
    %1201 = vmatpush1.msra.mxu0 0.0
    %1202 = vmatprep.subr.mxu0 0.0
    %1203 = vmatpush1.msra.mxu0 0.0
    %1204 = vmatprep.subr.mxu0 0.0
    %1205 = vmatpush1.msra.mxu0 0.0
    %1206 = vmatprep.subr.mxu0 0.0
    %1207 = vmatpush1.msra.mxu0 0.0
    %1208 = vmatprep.subr.mxu0 0.0
    %1209 = vmatpush1.msra.mxu0 0.0
    %1210 = vmatprep.subr.mxu0 0.0
    %1211 = vmatpush1.msra.mxu0 0.0
    %1212 = vmatprep.subr.mxu0 0.0
    %1213 = vmatpush1.msra.mxu0 0.0
    %1214 = vmatprep.subr.mxu0 0.0
    %1215 = vmatpush1.msra.mxu0 0.0
    %1216 = vmatprep.subr.mxu0 0.0
    %1217 = vmatpush1.msra.mxu0 0.0
    %1218 = vmatprep.subr.mxu0 0.0
    %1219 = vmatpush1.msra.mxu0 0.0
    %1220 = vmatprep.subr.mxu0 0.0
    %1221 = vmatpush1.msra.mxu0 0.0
    %1222 = vmatprep.subr.mxu0 0.0
    %1223 = vmatpush1.msra.mxu0 0.0
    %1224 = vmatprep.subr.mxu0 0.0
    %1225 = vmatpush1.msra.mxu0 0.0
    %1226 = vmatprep.subr.mxu0 0.0
    %1227 = vmatpush1.msra.mxu0 0.0
    %1228 = vmatprep.subr.mxu0 0.0
    %1229 = vmatpush1.msra.mxu0 0.0
    %1230 = vmatprep.subr.mxu0 0.0
    %1231 = vmatpush1.msra.mxu0 0.0
    %1232 = vmatprep.subr.mxu0 0.0
    %1233 = vmatpush1.msra.mxu0 0.0
    %1234 = vmatprep.subr.mxu0 0.0
    %1235 = vmatpush1.msra.mxu0 0.0
    %1236 = vmatprep.subr.mxu0 0.0
    %1237 = vmatpush1.msra.mxu0 0.0
    %1238 = vmatprep.subr.mxu0 0.0
    %1239 = vmatpush1.msra.mxu0 0.0
    %1240 = vmatprep.subr.mxu0 0.0
    %1241 = vmatpush1.msra.mxu0 0.0
    %1242 = vmatprep.mubr.f32.mxu0 0.0
    %1243 = vmatmul.mubr.f32.gmra.mrb[0].mxu0 %v1176
    %v1244 = vpop.f32.mrb[0].mxu0
    %v1245 = vadd.f32 0.0, %v1244
    %v1246 = vpop.f32.mrb[0].mxu0
    %1247 = vdwg.mxu0
    %v1249 = vrot.slane %v1245, 7
    %v1251 = vadd.f32 %v1062, %v1249
    %v1252 = vxor.u32 %v1251, 2147483648
    %v1253 = vmul.f32 %v1252, 1.442695
    %v1254 = vpow.pop %v1253
    %v1255 = vadd.f32 %v1254, 1.0
    %v1256 = vrcp.pop %v1255
    %v1257 = vmul.f32 1.0, %v1256
    %v1258 = vtanh.pop %v1251
    %v1260 = vrot.slane %v1166, 7
    %v1262 = vmul.f32 %v1257, %v1260
    %1264 = vrot.lane.b32.xlu0 %v1258, 64
    %v1265 = vpop.permute.xlu0 %1264
    %v1267 = vmul.f32 %v1257, %v1265
    %1269 = vrot.lane.b32.xlu0 %v1267, 32
    %v1270 = vpop.permute.xlu0 %1269
    %v1272 = vadd.f32 %v1262, %v1270
    %v1273 = vtanh.pop %v1272
    %1275 = vrot.lane.b32.xlu0 %v1273, 64
    %v1276 = vpop.permute.xlu0 %1275
    %v1278 = vmul.f32 %v1257, %v1276
    %v1280 = vrot.slane %v1278, 1
    %1281 = vrot.lane.b32.xlu0 %v1280, 32
    %v1282 = vpop.permute.xlu0 %1281
    %v1283 = vsel %vm242, %v1282, 0
    %1285 = vmatprep.subr.mxu0 0.0
    %1286 = vmatpush1.msra.mxu0 %v1065
    %1287 = vmatprep.subr.mxu0 0.0
    %1288 = vmatpush1.msra.mxu0 %v1066
    %1289 = vmatprep.subr.mxu0 0.0
    %1290 = vmatpush1.msra.mxu0 %v1067
    %1291 = vmatprep.subr.mxu0 0.0
    %1292 = vmatpush1.msra.mxu0 %v1068
    %1293 = vmatprep.subr.mxu0 0.0
    %1294 = vmatpush1.msra.mxu0 0.0
    %1295 = vmatprep.subr.mxu0 0.0
    %1296 = vmatpush1.msra.mxu0 0.0
    %1297 = vmatprep.subr.mxu0 0.0
    %1298 = vmatpush1.msra.mxu0 0.0
    %1299 = vmatprep.subr.mxu0 0.0
    %1300 = vmatpush1.msra.mxu0 0.0
    %1301 = vmatprep.subr.mxu0 0.0
    %1302 = vmatpush1.msra.mxu0 0.0
    %1303 = vmatprep.subr.mxu0 0.0
    %1304 = vmatpush1.msra.mxu0 0.0
    %1305 = vmatprep.subr.mxu0 0.0
    %1306 = vmatpush1.msra.mxu0 0.0
    %1307 = vmatprep.subr.mxu0 0.0
    %1308 = vmatpush1.msra.mxu0 0.0
    %1309 = vmatprep.subr.mxu0 0.0
    %1310 = vmatpush1.msra.mxu0 0.0
    %1311 = vmatprep.subr.mxu0 0.0
    %1312 = vmatpush1.msra.mxu0 0.0
    %1313 = vmatprep.subr.mxu0 0.0
    %1314 = vmatpush1.msra.mxu0 0.0
    %1315 = vmatprep.subr.mxu0 0.0
    %1316 = vmatpush1.msra.mxu0 0.0
    %1317 = vmatprep.subr.mxu0 0.0
    %1318 = vmatpush1.msra.mxu0 0.0
    %1319 = vmatprep.subr.mxu0 0.0
    %1320 = vmatpush1.msra.mxu0 0.0
    %1321 = vmatprep.subr.mxu0 0.0
    %1322 = vmatpush1.msra.mxu0 0.0
    %1323 = vmatprep.subr.mxu0 0.0
    %1324 = vmatpush1.msra.mxu0 0.0
    %1325 = vmatprep.subr.mxu0 0.0
    %1326 = vmatpush1.msra.mxu0 0.0
    %1327 = vmatprep.subr.mxu0 0.0
    %1328 = vmatpush1.msra.mxu0 0.0
    %1329 = vmatprep.subr.mxu0 0.0
    %1330 = vmatpush1.msra.mxu0 0.0
    %1331 = vmatprep.subr.mxu0 0.0
    %1332 = vmatpush1.msra.mxu0 0.0
    %1333 = vmatprep.subr.mxu0 0.0
    %1334 = vmatpush1.msra.mxu0 0.0
    %1335 = vmatprep.subr.mxu0 0.0
    %1336 = vmatpush1.msra.mxu0 0.0
    %1337 = vmatprep.subr.mxu0 0.0
    %1338 = vmatpush1.msra.mxu0 0.0
    %1339 = vmatprep.subr.mxu0 0.0
    %1340 = vmatpush1.msra.mxu0 0.0
    %1341 = vmatprep.subr.mxu0 0.0
    %1342 = vmatpush1.msra.mxu0 0.0
    %1343 = vmatprep.subr.mxu0 0.0
    %1344 = vmatpush1.msra.mxu0 0.0
    %1345 = vmatprep.subr.mxu0 0.0
    %1346 = vmatpush1.msra.mxu0 0.0
    %1347 = vmatprep.subr.mxu0 0.0
    %1348 = vmatpush1.msra.mxu0 0.0
    %1349 = vmatprep.mubr.f32.mxu0 0.0
    %1350 = vmatmul.mubr.f32.gmra.mrb[0].mxu0 %v1283
    %v1351 = vpop.f32.mrb[0].mxu0
    %v1352 = vadd.f32 0.0, %v1351
    %v1353 = vpop.f32.mrb[0].mxu0
    %1354 = vdwg.mxu0
    %v1356 = vrot.slane %v1352, 6
    %v1358 = vadd.f32 %v1062, %v1356
    %v1359 = vxor.u32 %v1358, 2147483648
    %v1360 = vmul.f32 %v1359, 1.442695
    %v1361 = vpow.pop %v1360
    %v1362 = vadd.f32 %v1361, 1.0
    %v1363 = vrcp.pop %v1362
    %v1364 = vmul.f32 1.0, %v1363
    %v1365 = vtanh.pop %v1358
    %v1367 = vrot.slane %v1272, 7
    %v1369 = vmul.f32 %v1364, %v1367
    %1371 = vrot.lane.b32.xlu0 %v1365, 64
    %v1372 = vpop.permute.xlu0 %1371
    %v1374 = vmul.f32 %v1364, %v1372
    %1376 = vrot.lane.b32.xlu0 %v1374, 32
    %v1377 = vpop.permute.xlu0 %1376
    %v1379 = vadd.f32 %v1369, %v1377
    %v1380 = vtanh.pop %v1379
    %1382 = vrot.lane.b32.xlu0 %v1380, 64
    %v1383 = vpop.permute.xlu0 %1382
    %v1385 = vmul.f32 %v1364, %v1383
    %v1387 = vrot.slane %v1385, 2
    %1388 = vrot.lane.b32.xlu0 %v1387, 32
    %v1389 = vpop.permute.xlu0 %1388
    %v1390 = vsel %vm242, %v1389, 0
    %1392 = vmatprep.subr.mxu0 0.0
    %1393 = vmatpush1.msra.mxu0 %v1065
    %1394 = vmatprep.subr.mxu0 0.0
    %1395 = vmatpush1.msra.mxu0 %v1066
    %1396 = vmatprep.subr.mxu0 0.0
    %1397 = vmatpush1.msra.mxu0 %v1067
    %1398 = vmatprep.subr.mxu0 0.0
    %1399 = vmatpush1.msra.mxu0 %v1068
    %1400 = vmatprep.subr.mxu0 0.0
    %1401 = vmatpush1.msra.mxu0 0.0
    %1402 = vmatprep.subr.mxu0 0.0
    %1403 = vmatpush1.msra.mxu0 0.0
    %1404 = vmatprep.subr.mxu0 0.0
    %1405 = vmatpush1.msra.mxu0 0.0
    %1406 = vmatprep.subr.mxu0 0.0
    %1407 = vmatpush1.msra.mxu0 0.0
    %1408 = vmatprep.subr.mxu0 0.0
    %1409 = vmatpush1.msra.mxu0 0.0
    %1410 = vmatprep.subr.mxu0 0.0
    %1411 = vmatpush1.msra.mxu0 0.0
    %1412 = vmatprep.subr.mxu0 0.0
    %1413 = vmatpush1.msra.mxu0 0.0
    %1414 = vmatprep.subr.mxu0 0.0
    %1415 = vmatpush1.msra.mxu0 0.0
    %1416 = vmatprep.subr.mxu0 0.0
    %1417 = vmatpush1.msra.mxu0 0.0
    %1418 = vmatprep.subr.mxu0 0.0
    %1419 = vmatpush1.msra.mxu0 0.0
    %1420 = vmatprep.subr.mxu0 0.0
    %1421 = vmatpush1.msra.mxu0 0.0
    %1422 = vmatprep.subr.mxu0 0.0
    %1423 = vmatpush1.msra.mxu0 0.0
    %1424 = vmatprep.subr.mxu0 0.0
    %1425 = vmatpush1.msra.mxu0 0.0
    %1426 = vmatprep.subr.mxu0 0.0
    %1427 = vmatpush1.msra.mxu0 0.0
    %1428 = vmatprep.subr.mxu0 0.0
    %1429 = vmatpush1.msra.mxu0 0.0
    %1430 = vmatprep.subr.mxu0 0.0
    %1431 = vmatpush1.msra.mxu0 0.0
    %1432 = vmatprep.subr.mxu0 0.0
    %1433 = vmatpush1.msra.mxu0 0.0
    %1434 = vmatprep.subr.mxu0 0.0
    %1435 = vmatpush1.msra.mxu0 0.0
    %1436 = vmatprep.subr.mxu0 0.0
    %1437 = vmatpush1.msra.mxu0 0.0
    %1438 = vmatprep.subr.mxu0 0.0
    %1439 = vmatpush1.msra.mxu0 0.0
    %1440 = vmatprep.subr.mxu0 0.0
    %1441 = vmatpush1.msra.mxu0 0.0
    %1442 = vmatprep.subr.mxu0 0.0
    %1443 = vmatpush1.msra.mxu0 0.0
    %1444 = vmatprep.subr.mxu0 0.0
    %1445 = vmatpush1.msra.mxu0 0.0
    %1446 = vmatprep.subr.mxu0 0.0
    %1447 = vmatpush1.msra.mxu0 0.0
    %1448 = vmatprep.subr.mxu0 0.0
    %1449 = vmatpush1.msra.mxu0 0.0
    %1450 = vmatprep.subr.mxu0 0.0
    %1451 = vmatpush1.msra.mxu0 0.0
    %1452 = vmatprep.subr.mxu0 0.0
    %1453 = vmatpush1.msra.mxu0 0.0
    %1454 = vmatprep.subr.mxu0 0.0
    %1455 = vmatpush1.msra.mxu0 0.0
    %1456 = vmatprep.mubr.f32.mxu0 0.0
    %1457 = vmatmul.mubr.f32.gmra.mrb[0].mxu0 %v1390
    %v1458 = vpop.f32.mrb[0].mxu0
    %v1459 = vadd.f32 0.0, %v1458
    %v1460 = vpop.f32.mrb[0].mxu0
    %1461 = vdwg.mxu0
    %v1463 = vrot.slane %v1459, 5
    %v1465 = vadd.f32 %v1062, %v1463
    %v1466 = vxor.u32 %v1465, 2147483648
    %v1467 = vmul.f32 %v1466, 1.442695
    %v1468 = vpow.pop %v1467
    %v1469 = vadd.f32 %v1468, 1.0
    %v1470 = vrcp.pop %v1469
    %v1471 = vmul.f32 1.0, %v1470
    %v1472 = vtanh.pop %v1465
    %v1474 = vrot.slane %v1379, 7
    %v1476 = vmul.f32 %v1471, %v1474
    %1478 = vrot.lane.b32.xlu0 %v1472, 64
    %v1479 = vpop.permute.xlu0 %1478
    %v1481 = vmul.f32 %v1471, %v1479
    %1483 = vrot.lane.b32.xlu0 %v1481, 32
    %v1484 = vpop.permute.xlu0 %1483
    %v1486 = vadd.f32 %v1476, %v1484
    %v1487 = vtanh.pop %v1486
    %1489 = vrot.lane.b32.xlu0 %v1487, 64
    %v1490 = vpop.permute.xlu0 %1489
    %v1492 = vmul.f32 %v1471, %v1490
    %vm1493 = vcmask 1040384
    %v1494 = vsel %vm1493, %v1172, %v1278
    %vm1495 = vcmask 1041408
    %v1496 = vsel %vm1495, %v1494, %v1385
    %vm1497 = vcmask 1042432
    %v1498 = vsel %vm1497, %v1496, %v1492
    %vm1499 = vcmp.ge.f32.partialorder %v1498, 0.0
    %v1500 = vmul.f32 %v1498, 0.01
    %v1501 = vsel %vm1499, %v1498, %v1500
    %v1502 = vld [vmem:[#allocation11] sm:$0xff]
    %v1503 = vld [vmem:[#allocation11 + $0x8] sm:$0xff]
    %v1504 = vld [vmem:[#allocation11 + $0x10] sm:$0xff]
    %v1505 = vld [vmem:[#allocation11 + $0x18] sm:$0xff]
    %v1507 = vlaneseq
    %v1508 = vshrl.u32 %v1507, 7
    %v1509 = vsub.s32 0, %v1508
    %v1510 = vrot.slane %v117, %v1509
    %1513 = vrot.lane.b32.xlu0 %v1501, 32
    %v1514 = vpop.permute.xlu0 %1513
    %v1515 = vsel %vm242, %v1514, 0
    %1517 = vmatprep.subr.mxu0 0.0
    %1518 = vmatpush1.msra.mxu0 %v1502
    %1519 = vmatprep.subr.mxu0 0.0
    %1520 = vmatpush1.msra.mxu0 %v1503
    %1521 = vmatprep.subr.mxu0 0.0
    %1522 = vmatpush1.msra.mxu0 %v1504
    %1523 = vmatprep.subr.mxu0 0.0
    %1524 = vmatpush1.msra.mxu0 %v1505
    %1525 = vmatprep.subr.mxu0 0.0
    %1526 = vmatpush1.msra.mxu0 0.0
    %1527 = vmatprep.subr.mxu0 0.0
    %1528 = vmatpush1.msra.mxu0 0.0
    %1529 = vmatprep.subr.mxu0 0.0
    %1530 = vmatpush1.msra.mxu0 0.0
    %1531 = vmatprep.subr.mxu0 0.0
    %1532 = vmatpush1.msra.mxu0 0.0
    %1533 = vmatprep.subr.mxu0 0.0
    %1534 = vmatpush1.msra.mxu0 0.0
    %1535 = vmatprep.subr.mxu0 0.0
    %1536 = vmatpush1.msra.mxu0 0.0
    %1537 = vmatprep.subr.mxu0 0.0
    %1538 = vmatpush1.msra.mxu0 0.0
    %1539 = vmatprep.subr.mxu0 0.0
    %1540 = vmatpush1.msra.mxu0 0.0
    %1541 = vmatprep.subr.mxu0 0.0
    %1542 = vmatpush1.msra.mxu0 0.0
    %1543 = vmatprep.subr.mxu0 0.0
    %1544 = vmatpush1.msra.mxu0 0.0
    %1545 = vmatprep.subr.mxu0 0.0
    %1546 = vmatpush1.msra.mxu0 0.0
    %1547 = vmatprep.subr.mxu0 0.0
    %1548 = vmatpush1.msra.mxu0 0.0
    %1549 = vmatprep.subr.mxu0 0.0
    %1550 = vmatpush1.msra.mxu0 0.0
    %1551 = vmatprep.subr.mxu0 0.0
    %1552 = vmatpush1.msra.mxu0 0.0
    %1553 = vmatprep.subr.mxu0 0.0
    %1554 = vmatpush1.msra.mxu0 0.0
    %1555 = vmatprep.subr.mxu0 0.0
    %1556 = vmatpush1.msra.mxu0 0.0
    %1557 = vmatprep.subr.mxu0 0.0
    %1558 = vmatpush1.msra.mxu0 0.0
    %1559 = vmatprep.subr.mxu0 0.0
    %1560 = vmatpush1.msra.mxu0 0.0
    %1561 = vmatprep.subr.mxu0 0.0
    %1562 = vmatpush1.msra.mxu0 0.0
    %1563 = vmatprep.subr.mxu0 0.0
    %1564 = vmatpush1.msra.mxu0 0.0
    %1565 = vmatprep.subr.mxu0 0.0
    %1566 = vmatpush1.msra.mxu0 0.0
    %1567 = vmatprep.subr.mxu0 0.0
    %1568 = vmatpush1.msra.mxu0 0.0
    %1569 = vmatprep.subr.mxu0 0.0
    %1570 = vmatpush1.msra.mxu0 0.0
    %1571 = vmatprep.subr.mxu0 0.0
    %1572 = vmatpush1.msra.mxu0 0.0
    %1573 = vmatprep.subr.mxu0 0.0
    %1574 = vmatpush1.msra.mxu0 0.0
    %1575 = vmatprep.subr.mxu0 0.0
    %1576 = vmatpush1.msra.mxu0 0.0
    %1577 = vmatprep.subr.mxu0 0.0
    %1578 = vmatpush1.msra.mxu0 0.0
    %1579 = vmatprep.subr.mxu0 0.0
    %1580 = vmatpush1.msra.mxu0 0.0
    %1581 = vmatprep.mubr.f32.mxu0 0.0
    %1582 = vmatmul.mubr.f32.gmra.mrb[0].mxu0 %v1515
    %v1583 = vpop.f32.mrb[0].mxu0
    %v1584 = vadd.f32 %v1510, %v1583
    %v1585 = vpop.f32.mrb[0].mxu0
    %1586 = vdwg.mxu0
    %1587 = vst [vmem:[#allocation13] sm:$0xf] %v1584
    %v1589 = vrot.slane %v1492, 3
    %v1592 = vrot.slane %v1486, 2
    %1593 = vrot.lane.b32.xlu0 %v1592, 64
    %v1594 = vpop.permute.xlu0 %1593
    %v1596 = vsel %vm1493, %v1589, %v1594
    %1598 = vrot.lane.b32.xlu0 %v1596, 32
    %v1599 = vpop.permute.xlu0 %1598
    %vm1601 = vcmask 254976
    %1602 = vst.msk [vmem:[%s10] sm:$0x3] %vm1601, %v1599
    // Predicated region
    $region62: #{_lambda_.1} parent=1 // pred_check
      _
    $region63: #{_lambda_.1} parent=1 // pred_check_branch
      %1604 = sbr.rel (0) target = $region65
    $region64: #{_lambda_.1} parent=1 // pred_region
      %s1606 = ssub.s32 64, 64
      %1607 = vsyncadd [#allocation4], %s1606
      %s1609 = sshll.u32 [#allocation13], 4
      %s1610 = int_to_ptr.vmem [resolvable:$true] %s1609
      %1612 = dma.vmem_to_hbm [thread:$0]  %s1610, 64, %s9, [#allocation4]
    $region65: #{_lambda_.1} parent=1 // pred_fallthru
      _
    // Predicated region
    $region66: #{_lambda_.1} parent=1 // pred_check
      _
    $region67: #{_lambda_.1} parent=1 // pred_check_branch
      %1614 = sbr.rel (0) target = $region69
    $region68: #{_lambda_.1} parent=1 // pred_region
      _
    $region69: #{_lambda_.1} parent=1 // pred_fallthru
      _
    // Predicated region
    $region70: #{_lambda_.1} parent=1 // pred_check
      _
    $region71: #{_lambda_.1} parent=1 // pred_check_branch
      %1616 = sbr.rel (0) target = $region73
    $region72: #{_lambda_.1} parent=1 // pred_region
      %1617 = dma.done [#allocation4], 64
    $region73: #{_lambda_.1} parent=1 // pred_fallthru
      _
    // Predicated region
    $region74: #{_lambda_.1} parent=1 // pred_check
      _
    $region75: #{_lambda_.1} parent=1 // pred_check_branch
      %1619 = sbr.rel (0) target = $region77
    $region76: #{_lambda_.1} parent=1 // pred_region
      _
    $region77: #{_lambda_.1} parent=1 // pred_fallthru
      _
    %1620 = vsyncpa [#allocation3], 1
    %1621 = vsyncpa [#allocation6], 1
    %1622 = vsyncpa [#allocation9], 1
    %1623 = vsyncpa [#allocation12], 1
    %1624 = vsyncpa [#allocation4], 1

</llo_original>
